<compile_context>
chip_gen: v6e
topology: v6e:2x2x1
jax: 0.10.0
libtpu: 0.0.40
codegen_flags: <defaults>
</compile_context>

<pallas_src>
import functools

import jax
import jax.numpy as jnp
import numpy as np
from jax import lax
from jax.experimental import pallas as pl
from jax.experimental.pallas import tpu as pltpu


# f32 keeps the correctness check against the f32 reference tight.
# TODO(synk): flip to bfloat16 on v6e/v7x (keep f32 MXU accumulation) for ~2x
# MXU throughput and half the HBM/VMEM bytes once a bf16 tolerance is agreed.
COMPUTE_DTYPE = jnp.float32


def _vmem_limit_bytes():
    """~75% of physical VMEM (≈48 MiB on v7x, ≈96 MiB on v5e/v6e)."""
    try:
        info = pltpu.get_tpu_info()
        cap = getattr(info, "vmem_capacity_bytes", None)
        if cap:
            return int(cap * 3 // 4)
    except Exception:
        pass
    return 64 * 1024 * 1024


# ---------------------------------------------------------------------------
# Pallas kernel: fused 3x3 conv (stride 1, zero pad 1) + bias + ReLU
#                [+ fused 2x2/2 max-pool epilogue]
# ---------------------------------------------------------------------------
def _conv3x3_relu_kernel(x_ref, xtop_ref, xbot_ref, w_ref, b_ref, o_ref,
                         xpad_ref, p_ref, *, fuse_pool):
    """Grid: (N, row_blocks, cout_blocks); Cout innermost so the im2col patch
    matrix (built once per (n, row_block)) amortizes over the Cout tiles.

    x_ref   : (1, TH, W, Cin)  unpadded activation row block
    xtop_ref: (1, 1, W, Cin)   row above the block (ignored when r == 0)
    xbot_ref: (1, 1, W, Cin)   row below the block (ignored when r == last)
    w_ref   : (9*Cin, TC)      3x3 taps folded into the contraction dim
    b_ref   : (1, TC)
    o_ref   : (1, TH, W, TC)   or (1, TH//2, W//2, TC) when fuse_pool
    xpad_ref: VMEM (TH+2, W+2, Cin) scratch — row block with 1-px halo
    p_ref   : VMEM (TH*W, 9*Cin)    scratch — im2col patch matrix
    """
    _, TH, W, Cin = x_ref.shape
    tc = o_ref.shape[-1]
    r = pl.program_id(1)
    c = pl.program_id(2)
    n_rows = pl.num_programs(1)

    # Build the zero-padded halo block + im2col patches once per (n, row).
    @pl.when(c == 0)
    def _build_patches():
        xpad_ref[...] = jnp.zeros((TH + 2, W + 2, Cin), xpad_ref.dtype)
        xpad_ref[1:TH + 1, 1:W + 1, :] = x_ref[0]

        @pl.when(r > 0)
        def _():
            xpad_ref[0:1, 1:W + 1, :] = xtop_ref[0]

        @pl.when(r < n_rows - 1)
        def _():
            xpad_ref[TH + 1:TH + 2, 1:W + 1, :] = xbot_ref[0]

        # Fold all 9 taps into K (column k*Cin + ci holds x[h+dy-1, w+dx-1, ci]).
        for k in range(9):
            dy, dx = k // 3, k % 3
            p_ref[:, k * Cin:(k + 1) * Cin] = (
                xpad_ref[dy:dy + TH, dx:dx + W, :].reshape(TH * W, Cin))

    # One MXU matmul with K = 9*Cin (instead of 9 tiny-K matmuls).
    acc = jnp.dot(p_ref[...], w_ref[...], preferred_element_type=jnp.float32)
    acc = jnp.maximum(acc + b_ref[...], 0.0)

    if fuse_pool:
        y = acc.reshape(TH, W // 2, 2, tc)
        y = jnp.maximum(y[:, :, 0, :], y[:, :, 1, :])     # pool along width
        y = y.reshape(TH // 2, 2, W // 2, tc)
        y = jnp.maximum(y[:, 0, :, :], y[:, 1, :, :])     # pool along height
        o_ref[...] = y[None].astype(o_ref.dtype)
    else:
        o_ref[...] = acc.reshape(1, TH, W, tc).astype(o_ref.dtype)


# ---------------------------------------------------------------------------
# Wrapper
# ---------------------------------------------------------------------------
def conv3x3_relu(x, w_oihw, b, *, fuse_pool=False):
    """x: (N, H, W, Cin) f32; w_oihw: (Cout, Cin, 3, 3); b: (Cout,).

    Returns (N, H, W, Cout), or (N, H//2, W//2, Cout) when fuse_pool=True
    (Conv -> ReLU -> MaxPool2d(2,2) fused).
    """
    N, H, W, Cin = x.shape
    Cout = w_oihw.shape[0]

    # OIHW -> (dy, dx, Cin, Cout) -> (9*Cin, Cout): taps folded into K.
    w = jnp.transpose(w_oihw, (2, 3, 1, 0)).reshape(9 * Cin, Cout)
    w = w.astype(COMPUTE_DTYPE)
    b2 = b.reshape(1, Cout).astype(jnp.float32)
    x = x.astype(COMPUTE_DTYPE)

    # Row-block tiling (bounds VMEM/vreg pressure, lets output DMA overlap
    # compute) and Cout tiling at <=256 lanes.
    TH = min(H, 8)
    if H % TH != 0 or (fuse_pool and TH % 2 != 0):
        TH = H
    TC = Cout if Cout <= 256 else 256
    n_rb = H // TH
    n_cb = Cout // TC
    THo, Ho, Wo = (TH // 2, H // 2, W // 2) if fuse_pool else (TH, H, W)

    # TODO(synk): for the tiny-spatial late layers (H*W <= 16) fold the batch
    # dimension into the matmul M dimension to better fill the MXU.

    kernel = functools.partial(_conv3x3_relu_kernel, fuse_pool=fuse_pool)

    x_spec = pl.BlockSpec((1, TH, W, Cin), lambda n, r, c: (n, r, 0, 0))
    xtop_spec = pl.BlockSpec(
        (1, 1, W, Cin),
        lambda n, r, c: (n, jnp.maximum(r * TH - 1, 0), 0, 0))
    xbot_spec = pl.BlockSpec(
        (1, 1, W, Cin),
        lambda n, r, c: (n, jnp.minimum(r * TH + TH, H - 1), 0, 0))
    w_spec = pl.BlockSpec((9 * Cin, TC), lambda n, r, c: (0, c))
    b_spec = pl.BlockSpec((1, TC), lambda n, r, c: (0, c))
    o_spec = pl.BlockSpec((1, THo, Wo, TC), lambda n, r, c: (n, r, 0, c))

    return pl.pallas_call(
        kernel,
        out_shape=jax.ShapeDtypeStruct((N, Ho, Wo, Cout), jnp.float32),
        grid_spec=pltpu.PrefetchScalarGridSpec(
            num_scalar_prefetch=0,
            grid=(N, n_rb, n_cb),
            in_specs=[x_spec, xtop_spec, xbot_spec, w_spec, b_spec],
            out_specs=o_spec,
            scratch_shapes=[
                pltpu.VMEM((TH + 2, W + 2, Cin), COMPUTE_DTYPE),
                pltpu.VMEM((TH * W, 9 * Cin), COMPUTE_DTYPE),
            ],
        ),
        compiler_params=pltpu.CompilerParams(
            dimension_semantics=("parallel", "parallel", "arbitrary"),
            vmem_limit_bytes=_vmem_limit_bytes(),
        ),
    )(x, x, x, w, b2)


# ---------------------------------------------------------------------------
# VGG19 slice structure (before_relu=False). Each entry: (cin, cout, fused_pool)
# — the MaxPool2d that follows a Conv+ReLU is fused into that conv's kernel.
# ---------------------------------------------------------------------------
VGG19_SLICES = [
    # slice1: layers 0..1
    [(3, 64, False)],
    # slice2: layers 2..6  (conv, relu, pool, conv, relu)
    [(64, 64, True), (64, 128, False)],
    # slice3: layers 7..11
    [(128, 128, True), (128, 256, False)],
    # slice4: layers 12..20
    [(256, 256, False), (256, 256, False), (256, 256, True), (256, 512, False)],
    # slice5: layers 21..29
    [(512, 512, False), (512, 512, False), (512, 512, True), (512, 512, False)],
]


def init_params(key):
    params = []
    for slice_ops in VGG19_SLICES:
        sp = []
        for cin, cout, _ in slice_ops:
            key, kw, kb = jax.random.split(key, 3)
            std = (2.0 / (9.0 * cin)) ** 0.5
            w = jax.random.normal(kw, (cout, cin, 3, 3), jnp.float32) * std
            bb = jax.random.normal(kb, (cout,), jnp.float32) * 0.01
            sp.append((w, bb))
        params.append(sp)
    return params


def vgg19_forward(x_nchw, params):
    """x_nchw: (N, 3, H, W) float32 -> list of 5 NCHW feature maps."""
    h = jnp.transpose(x_nchw, (0, 2, 3, 1)).astype(jnp.float32)  # NCHW -> NHWC
    outs = []
    for slice_ops, slice_params in zip(VGG19_SLICES, params):
        for (_, _, pool), (w, bb) in zip(slice_ops, slice_params):
            h = conv3x3_relu(h, w, bb, fuse_pool=pool)
        outs.append(jnp.transpose(h, (0, 3, 1, 2)))  # NHWC -> NCHW
    return outs


def vgg19_forward_ref(x_nchw, params):
    """Pure-JAX reference (lax.conv / reduce_window) for correctness check."""
    h = jnp.transpose(x_nchw, (0, 2, 3, 1)).astype(jnp.float32)
    outs = []
    for slice_ops, slice_params in zip(VGG19_SLICES, params):
        for (_, _, pool), (w, bb) in zip(slice_ops, slice_params):
            w_hwio = jnp.transpose(w, (2, 3, 1, 0))
            h = lax.conv_general_dilated(
                h, w_hwio, window_strides=(1, 1), padding="SAME",
                dimension_numbers=("NHWC", "HWIO", "NHWC"),
                precision=lax.Precision.HIGHEST) + bb
            h = jnp.maximum(h, 0.0)
            if pool:
                h = lax.reduce_window(h, -jnp.inf, lax.max,
                                      (1, 2, 2, 1), (1, 2, 2, 1), "VALID")
        outs.append(jnp.transpose(h, (0, 3, 1, 2)))
    return outs


if __name__ == "__main__":
    key = jax.random.PRNGKey(0)
    k_x, k_p = jax.random.split(key)
    # Small image consistent with the module: batch=2, 3 channels, 16x16.
    x = jax.random.normal(k_x, (2, 3, 16, 16), jnp.float32)
    params = init_params(k_p)

    outs = jax.block_until_ready(vgg19_forward(x, params))
    refs = jax.block_until_ready(vgg19_forward_ref(x, params))

    expected_shapes = [(2, 64, 16, 16), (2, 128, 8, 8), (2, 256, 4, 4),
                       (2, 512, 2, 2), (2, 512, 1, 1)]
    for i, (o, r_, es) in enumerate(zip(outs, refs, expected_shapes)):
        assert o.shape == es, (i, o.shape, es)
        assert o.dtype == jnp.float32
        np.testing.assert_allclose(np.asarray(o), np.asarray(r_),
                                   rtol=2e-3, atol=2e-3)

    print("KERNEL_OK")
</pallas_src>

<mosaic_0001>
module attributes {stable_mosaic.version = 11 : i64} {
  func.func @_conv3x3_relu_kernel(%arg0: i32, %arg1: i32, %arg2: i32, %arg3: memref<1x8x16x3xf32, #tpu.memory_space<vmem>>, %arg4: memref<1x1x16x3xf32, #tpu.memory_space<vmem>>, %arg5: memref<1x1x16x3xf32, #tpu.memory_space<vmem>>, %arg6: memref<27x64xf32, #tpu.memory_space<vmem>>, %arg7: memref<1x64xf32, #tpu.memory_space<vmem>>, %arg8: memref<1x8x16x64xf32, #tpu.memory_space<vmem>>, %arg9: memref<10x18x3xf32, #tpu.memory_space<vmem>>, %arg10: memref<128x27xf32, #tpu.memory_space<vmem>>) attributes {dimension_semantics = [#tpu.dimension_semantics<parallel>, #tpu.dimension_semantics<parallel>, #tpu.dimension_semantics<arbitrary>], iteration_bounds = array<i64: 2, 2, 1>, scalar_prefetch = 0 : i64, scratch_operands = 2 : i64, tpu.core_type = #tpu.core_type<tc>, window_params = [{transform_indices = @transform_0, window_bounds = array<i64: 1, 8, 16, 3>}, {transform_indices = @transform_1, window_bounds = array<i64: 1, 1, 16, 3>}, {transform_indices = @transform_2, window_bounds = array<i64: 1, 1, 16, 3>}, {transform_indices = @transform_3, window_bounds = array<i64: 27, 64>}, {transform_indices = @transform_4, window_bounds = array<i64: 1, 64>}, {transform_indices = @transform_5, window_bounds = array<i64: 1, 8, 16, 64>}]} {
    %c0_i32 = arith.constant 0 : i32
    %0 = arith.cmpi eq, %arg2, %c0_i32 : i32
    %1 = arith.extui %0 : i1 to i32
    %c0_i32_0 = arith.constant 0 : i32
    %2 = arith.cmpi ne, %1, %c0_i32_0 : i32
    scf.if %2 {
      %cst_11 = arith.constant 0.000000e+00 : f32
      %13 = vector.broadcast %cst_11 : f32 to vector<10x18x3xf32>
      %c0_12 = arith.constant 0 : index
      %c0_13 = arith.constant 0 : index
      %c0_14 = arith.constant 0 : index
      %14 = vector.load %arg9[%c0_12, %c0_13, %c0_14] : memref<10x18x3xf32, #tpu.memory_space<vmem>>, vector<10x18x3xf32>
      tpu.vector_store %arg9[%c0_12, %c0_13, %c0_14], %13 {strides = array<i32>} : memref<10x18x3xf32, #tpu.memory_space<vmem>>, vector<10x18x3xf32>,
      %c0_15 = arith.constant 0 : index
      %c0_16 = arith.constant 0 : index
      %c0_17 = arith.constant 0 : index
      %c0_18 = arith.constant 0 : index
      %15 = vector.load %arg3[%c0_15, %c0_16, %c0_17, %c0_18] : memref<1x8x16x3xf32, #tpu.memory_space<vmem>>, vector<1x8x16x3xf32>
      %16 = vector.shape_cast %15 : vector<1x8x16x3xf32> to vector<8x16x3xf32>
      %c1 = arith.constant 1 : index
      %c1_19 = arith.constant 1 : index
      %c0_20 = arith.constant 0 : index
      %17 = vector.load %arg9[%c1, %c1_19, %c0_20] : memref<10x18x3xf32, #tpu.memory_space<vmem>>, vector<8x16x3xf32>
      tpu.vector_store %arg9[%c1, %c1_19, %c0_20], %16 {strides = array<i32>} : memref<10x18x3xf32, #tpu.memory_space<vmem>>, vector<8x16x3xf32>,
      %c0_i32_21 = arith.constant 0 : i32
      %18 = arith.cmpi sgt, %arg1, %c0_i32_21 : i32
      %19 = arith.extui %18 : i1 to i32
      %c0_i32_22 = arith.constant 0 : i32
      %20 = arith.cmpi ne, %19, %c0_i32_22 : i32
      scf.if %20 {
        %c0_60 = arith.constant 0 : index
        %c0_61 = arith.constant 0 : index
        %c0_62 = arith.constant 0 : index
        %c0_63 = arith.constant 0 : index
        %51 = vector.load %arg4[%c0_60, %c0_61, %c0_62, %c0_63] : memref<1x1x16x3xf32, #tpu.memory_space<vmem>>, vector<1x1x16x3xf32>
        %52 = vector.shape_cast %51 : vector<1x1x16x3xf32> to vector<1x16x3xf32>
        %c0_64 = arith.constant 0 : index
        %c1_65 = arith.constant 1 : index
        %c0_66 = arith.constant 0 : index
        %53 = vector.load %arg9[%c0_64, %c1_65, %c0_66] : memref<10x18x3xf32, #tpu.memory_space<vmem>>, vector<1x16x3xf32>
        tpu.vector_store %arg9[%c0_64, %c1_65, %c0_66], %52 {strides = array<i32>} : memref<10x18x3xf32, #tpu.memory_space<vmem>>, vector<1x16x3xf32>,
      } else {
      }
      %c1_i32 = arith.constant 1 : i32
      %21 = arith.cmpi slt, %arg1, %c1_i32 : i32
      %22 = arith.extui %21 : i1 to i32
      %c0_i32_23 = arith.constant 0 : i32
      %23 = arith.cmpi ne, %22, %c0_i32_23 : i32
      scf.if %23 {
        %c0_60 = arith.constant 0 : index
        %c0_61 = arith.constant 0 : index
        %c0_62 = arith.constant 0 : index
        %c0_63 = arith.constant 0 : index
        %51 = vector.load %arg5[%c0_60, %c0_61, %c0_62, %c0_63] : memref<1x1x16x3xf32, #tpu.memory_space<vmem>>, vector<1x1x16x3xf32>
        %52 = vector.shape_cast %51 : vector<1x1x16x3xf32> to vector<1x16x3xf32>
        %c9_64 = arith.constant 9 : index
        %c1_65 = arith.constant 1 : index
        %c0_66 = arith.constant 0 : index
        %53 = vector.load %arg9[%c9_64, %c1_65, %c0_66] : memref<10x18x3xf32, #tpu.memory_space<vmem>>, vector<1x16x3xf32>
        tpu.vector_store %arg9[%c9_64, %c1_65, %c0_66], %52 {strides = array<i32>} : memref<10x18x3xf32, #tpu.memory_space<vmem>>, vector<1x16x3xf32>,
      } else {
      }
      %c0_24 = arith.constant 0 : index
      %c0_25 = arith.constant 0 : index
      %c0_26 = arith.constant 0 : index
      %24 = vector.load %arg9[%c0_24, %c0_25, %c0_26] : memref<10x18x3xf32, #tpu.memory_space<vmem>>, vector<8x16x3xf32>
      %25 = vector.shape_cast %24 : vector<8x16x3xf32> to vector<128x3xf32>
      %c0_27 = arith.constant 0 : index
      %c0_28 = arith.constant 0 : index
      %26 = vector.load %arg10[%c0_27, %c0_28] : memref<128x27xf32, #tpu.memory_space<vmem>>, vector<128x3xf32>
      tpu.vector_store %arg10[%c0_27, %c0_28], %25 {strides = array<i32>} : memref<128x27xf32, #tpu.memory_space<vmem>>, vector<128x3xf32>,
      %c0_29 = arith.constant 0 : index
      %c1_30 = arith.constant 1 : index
      %c0_31 = arith.constant 0 : index
      %27 = vector.load %arg9[%c0_29, %c1_30, %c0_31] : memref<10x18x3xf32, #tpu.memory_space<vmem>>, vector<8x16x3xf32>
      %28 = vector.shape_cast %27 : vector<8x16x3xf32> to vector<128x3xf32>
      %c0_32 = arith.constant 0 : index
      %c3 = arith.constant 3 : index
      %29 = vector.load %arg10[%c0_32, %c3] : memref<128x27xf32, #tpu.memory_space<vmem>>, vector<128x3xf32>
      tpu.vector_store %arg10[%c0_32, %c3], %28 {strides = array<i32>} : memref<128x27xf32, #tpu.memory_space<vmem>>, vector<128x3xf32>,
      %c0_33 = arith.constant 0 : index
      %c2 = arith.constant 2 : index
      %c0_34 = arith.constant 0 : index
      %30 = vector.load %arg9[%c0_33, %c2, %c0_34] : memref<10x18x3xf32, #tpu.memory_space<vmem>>, vector<8x16x3xf32>
      %31 = vector.shape_cast %30 : vector<8x16x3xf32> to vector<128x3xf32>
      %c0_35 = arith.constant 0 : index
      %c6 = arith.constant 6 : index
      %32 = vector.load %arg10[%c0_35, %c6] : memref<128x27xf32, #tpu.memory_space<vmem>>, vector<128x3xf32>
      tpu.vector_store %arg10[%c0_35, %c6], %31 {strides = array<i32>} : memref<128x27xf32, #tpu.memory_space<vmem>>, vector<128x3xf32>,
      %c1_36 = arith.constant 1 : index
      %c0_37 = arith.constant 0 : index
      %c0_38 = arith.constant 0 : index
      %33 = vector.load %arg9[%c1_36, %c0_37, %c0_38] : memref<10x18x3xf32, #tpu.memory_space<vmem>>, vector<8x16x3xf32>
      %34 = vector.shape_cast %33 : vector<8x16x3xf32> to vector<128x3xf32>
      %c0_39 = arith.constant 0 : index
      %c9 = arith.constant 9 : index
      %35 = vector.load %arg10[%c0_39, %c9] : memref<128x27xf32, #tpu.memory_space<vmem>>, vector<128x3xf32>
      tpu.vector_store %arg10[%c0_39, %c9], %34 {strides = array<i32>} : memref<128x27xf32, #tpu.memory_space<vmem>>, vector<128x3xf32>,
      %c1_40 = arith.constant 1 : index
      %c1_41 = arith.constant 1 : index
      %c0_42 = arith.constant 0 : index
      %36 = vector.load %arg9[%c1_40, %c1_41, %c0_42] : memref<10x18x3xf32, #tpu.memory_space<vmem>>, vector<8x16x3xf32>
      %37 = vector.shape_cast %36 : vector<8x16x3xf32> to vector<128x3xf32>
      %c0_43 = arith.constant 0 : index
      %c12 = arith.constant 12 : index
      %38 = vector.load %arg10[%c0_43, %c12] : memref<128x27xf32, #tpu.memory_space<vmem>>, vector<128x3xf32>
      tpu.vector_store %arg10[%c0_43, %c12], %37 {strides = array<i32>} : memref<128x27xf32, #tpu.memory_space<vmem>>, vector<128x3xf32>,
      %c1_44 = arith.constant 1 : index
      %c2_45 = arith.constant 2 : index
      %c0_46 = arith.constant 0 : index
      %39 = vector.load %arg9[%c1_44, %c2_45, %c0_46] : memref<10x18x3xf32, #tpu.memory_space<vmem>>, vector<8x16x3xf32>
      %40 = vector.shape_cast %39 : vector<8x16x3xf32> to vector<128x3xf32>
      %c0_47 = arith.constant 0 : index
      %c15 = arith.constant 15 : index
      %41 = vector.load %arg10[%c0_47, %c15] : memref<128x27xf32, #tpu.memory_space<vmem>>, vector<128x3xf32>
      tpu.vector_store %arg10[%c0_47, %c15], %40 {strides = array<i32>} : memref<128x27xf32, #tpu.memory_space<vmem>>, vector<128x3xf32>,
      %c2_48 = arith.constant 2 : index
      %c0_49 = arith.constant 0 : index
      %c0_50 = arith.constant 0 : index
      %42 = vector.load %arg9[%c2_48, %c0_49, %c0_50] : memref<10x18x3xf32, #tpu.memory_space<vmem>>, vector<8x16x3xf32>
      %43 = vector.shape_cast %42 : vector<8x16x3xf32> to vector<128x3xf32>
      %c0_51 = arith.constant 0 : index
      %c18 = arith.constant 18 : index
      %44 = vector.load %arg10[%c0_51, %c18] : memref<128x27xf32, #tpu.memory_space<vmem>>, vector<128x3xf32>
      tpu.vector_store %arg10[%c0_51, %c18], %43 {strides = array<i32>} : memref<128x27xf32, #tpu.memory_space<vmem>>, vector<128x3xf32>,
      %c2_52 = arith.constant 2 : index
      %c1_53 = arith.constant 1 : index
      %c0_54 = arith.constant 0 : index
      %45 = vector.load %arg9[%c2_52, %c1_53, %c0_54] : memref<10x18x3xf32, #tpu.memory_space<vmem>>, vector<8x16x3xf32>
      %46 = vector.shape_cast %45 : vector<8x16x3xf32> to vector<128x3xf32>
      %c0_55 = arith.constant 0 : index
      %c21 = arith.constant 21 : index
      %47 = vector.load %arg10[%c0_55, %c21] : memref<128x27xf32, #tpu.memory_space<vmem>>, vector<128x3xf32>
      tpu.vector_store %arg10[%c0_55, %c21], %46 {strides = array<i32>} : memref<128x27xf32, #tpu.memory_space<vmem>>, vector<128x3xf32>,
      %c2_56 = arith.constant 2 : index
      %c2_57 = arith.constant 2 : index
      %c0_58 = arith.constant 0 : index
      %48 = vector.load %arg9[%c2_56, %c2_57, %c0_58] : memref<10x18x3xf32, #tpu.memory_space<vmem>>, vector<8x16x3xf32>
      %49 = vector.shape_cast %48 : vector<8x16x3xf32> to vector<128x3xf32>
      %c0_59 = arith.constant 0 : index
      %c24 = arith.constant 24 : index
      %50 = vector.load %arg10[%c0_59, %c24] : memref<128x27xf32, #tpu.memory_space<vmem>>, vector<128x3xf32>
      tpu.vector_store %arg10[%c0_59, %c24], %49 {strides = array<i32>} : memref<128x27xf32, #tpu.memory_space<vmem>>, vector<128x3xf32>,
    } else {
    }
    %c0 = arith.constant 0 : index
    %c0_1 = arith.constant 0 : index
    %3 = vector.load %arg10[%c0, %c0_1] : memref<128x27xf32, #tpu.memory_space<vmem>>, vector<128x27xf32>
    %c0_2 = arith.constant 0 : index
    %c0_3 = arith.constant 0 : index
    %4 = vector.load %arg6[%c0_2, %c0_3] : memref<27x64xf32, #tpu.memory_space<vmem>>, vector<27x64xf32>
    %cst = arith.constant dense<0.000000e+00> : vector<128x64xf32>
    %5 = tpu.matmul %3, %4, %cst {dimension_numbers = #tpu.dot_dimension_numbers<[1], [0], [0], [1], [0, 0, 1, 1], [], []>} : vector<128x27xf32>, vector<27x64xf32>, vector<128x64xf32> -> vector<128x64xf32>
    %c0_4 = arith.constant 0 : index
    %c0_5 = arith.constant 0 : index
    %6 = vector.load %arg7[%c0_4, %c0_5] : memref<1x64xf32, #tpu.memory_space<vmem>>, vector<1x64xf32>
    %7 = vector.broadcast %6 : vector<1x64xf32> to vector<128x64xf32>
    %8 = arith.addf %5, %7 : vector<128x64xf32>
    %cst_6 = arith.constant 0.000000e+00 : f32
    %9 = vector.broadcast %cst_6 : f32 to vector<128x64xf32>
    %10 = arith.maximumf %8, %9 : vector<128x64xf32>
    %11 = vector.shape_cast %10 : vector<128x64xf32> to vector<1x8x16x64xf32>
    %c0_7 = arith.constant 0 : index
    %c0_8 = arith.constant 0 : index
    %c0_9 = arith.constant 0 : index
    %c0_10 = arith.constant 0 : index
    %12 = vector.load %arg8[%c0_7, %c0_8, %c0_9, %c0_10] : memref<1x8x16x64xf32, #tpu.memory_space<vmem>>, vector<1x8x16x64xf32>
    tpu.vector_store %arg8[%c0_7, %c0_8, %c0_9, %c0_10], %11 {strides = array<i32>} : memref<1x8x16x64xf32, #tpu.memory_space<vmem>>, vector<1x8x16x64xf32>,
    return
  }
  func.func @transform_0(%arg0: i32, %arg1: i32, %arg2: i32) -> (i32, i32, i32, i32) {
    %c0_i32 = arith.constant 0 : i32
    %c0_i32_0 = arith.constant 0 : i32
    %c0_i32_1 = arith.constant 0 : i32
    return %arg0, %arg1, %c0_i32, %c0_i32_0 : i32, i32, i32, i32
  }
  func.func @transform_1(%arg0: i32, %arg1: i32, %arg2: i32) -> (i32, i32, i32, i32) {
    %c8_i32 = arith.constant 8 : i32
    %0 = arith.muli %arg1, %c8_i32 : i32
    %c1_i32 = arith.constant 1 : i32
    %1 = arith.subi %0, %c1_i32 : i32
    %c0_i32 = arith.constant 0 : i32
    %2 = arith.maxsi %1, %c0_i32 : i32
    %c0_i32_0 = arith.constant 0 : i32
    %c0_i32_1 = arith.constant 0 : i32
    %c0_i32_2 = arith.constant 0 : i32
    return %arg0, %2, %c0_i32_0, %c0_i32_1 : i32, i32, i32, i32
  }
  func.func @transform_2(%arg0: i32, %arg1: i32, %arg2: i32) -> (i32, i32, i32, i32) {
    %c8_i32 = arith.constant 8 : i32
    %0 = arith.muli %arg1, %c8_i32 : i32
    %c8_i32_0 = arith.constant 8 : i32
    %1 = arith.addi %0, %c8_i32_0 : i32
    %c15_i32 = arith.constant 15 : i32
    %2 = arith.minsi %1, %c15_i32 : i32
    %c0_i32 = arith.constant 0 : i32
    %c0_i32_1 = arith.constant 0 : i32
    %c0_i32_2 = arith.constant 0 : i32
    return %arg0, %2, %c0_i32, %c0_i32_1 : i32, i32, i32, i32
  }
  func.func @transform_3(%arg0: i32, %arg1: i32, %arg2: i32) -> (i32, i32) {
    %c0_i32 = arith.constant 0 : i32
    %c0_i32_0 = arith.constant 0 : i32
    return %c0_i32, %arg2 : i32, i32
  }
  func.func @transform_4(%arg0: i32, %arg1: i32, %arg2: i32) -> (i32, i32) {
    %c0_i32 = arith.constant 0 : i32
    %c0_i32_0 = arith.constant 0 : i32
    return %c0_i32, %arg2 : i32, i32
  }
  func.func @transform_5(%arg0: i32, %arg1: i32, %arg2: i32) -> (i32, i32, i32, i32) {
    %c0_i32 = arith.constant 0 : i32
    %c0_i32_0 = arith.constant 0 : i32
    return %arg0, %arg1, %c0_i32, %arg2 : i32, i32, i32, i32
  }
}

</mosaic_0001>

<llo_original>
// kernel: tpu_custom_call.1
$region0: #{tpu_custom_call.1}
  #allocation0 [shape = 'u32[]', space=smem, size = 0x4, offset = 0x4, fixed_abs, tag = 'smem constant byte address 0x4 - core index']
  #allocation1 [shape = 'u32[144,128]{1,0:T(1,128)}', space=vmem, size = 0x12000, scoped, tag = 'internal scratch']
  #allocation2 [shape = 'f32[10,18,3]{2,1,0:T(8,128)}', space=vmem, size = 0x1e000, scoped, tag = 'scratch operand']
  #allocation3 [shape = 'f32[128,27]{1,0:T(8,128)}', space=vmem, size = 0x10000, scoped, tag = 'scratch operand']
  %s0 = inlined_call_operand.vmem [shape: f32[2,16,16,3], index: 0, kind: input, shape index: {}]
  %s1 = inlined_call_operand.vmem [shape: f32[2,16,16,3], index: 1, kind: input, shape index: {}]
  %s2 = inlined_call_operand.vmem [shape: f32[2,16,16,3], index: 2, kind: input, shape index: {}]
  %s3 = inlined_call_operand.vmem [shape: f32[27,64], index: 3, kind: input, shape index: {}]
  %s4 = inlined_call_operand.vmem [shape: f32[1,64], index: 4, kind: input, shape index: {}]
  %s5 = inlined_call_operand.hbm [shape: f32[2,16,16,64], index: 5, kind: output, shape index: {}]
  %s6 = sld [smem:[#allocation0]]
  $region65: #{tpu_custom_call.1} parent=0
    _
  %s8 = ssub.s32 1, %s6
  %s9 = scalar_select 0, %s8, %s6
  $region1: #{tpu_custom_call.1} parent=0
    #allocation4 [shape = 'u8[131072]{0}', space=vmem, size = 0x20000, scoped, tag = 'output window, operand 0']
    #allocation5 [shape = 's32[2]{0}', space=sflag, size = 0x8, scoped, tag = 'scoped memory for tpu_custom_call.1']
    %10 = vsyncpa [#allocation5], 0
    %s11 = scalar_lea.sflag [#allocation5], 1
    %12 = vsyncpa %s11, 0
    loop: start=0, step=1, limit=6
    $region2: #{tpu_custom_call.1} parent=1 // loop_pre_header
      _
    $region3: #{tpu_custom_call.1} parent=1 // loop_header
      %s14 = sphi 0, %s18
      %p15 = scmp.ge.s32.totalorder %s14, 6
      %s21 = sphi 0, %s40
      %s22 = sphi 0, %s36
      %s23 = sphi 0, %s32
      %s24 = sphi 0, %s21
      %s25 = sphi 0, %s22
      %s26 = sphi 0, %s23
      %s27 = sphi 0, %s24
      %s28 = sphi 0, %s25
      %s29 = sphi 0, %s26
      %s45 = sphi 0, %s47
      %s48 = sphi 0, %s45
      %s49 = sphi 0, %s48
      %s65 = sphi 0, %s49
      %s81 = sphi 0, %s83
      %s84 = sphi 0, %s81
      %s85 = sphi 0, %s84
      %s101 = sphi 0, %s85
      %s117 = sphi 0, %s119
      %s120 = sphi 0, %s117
      %s121 = sphi 0, %s120
      %s137 = sphi 0, %s121
      %s143 = sphi 0, %s145
      %s146 = sphi 0, %s143
      %s147 = sphi 0, %s146
      %s163 = sphi 0, %s147
      %s169 = sphi 0, %s171
      %s172 = sphi 0, %s169
      %s173 = sphi 0, %s172
      %s189 = sphi 0, %s173
      %s199 = sphi 0, %s201
      %s202 = sphi 0, %s199
      %s203 = sphi 0, %s202
      %s219 = sphi 0, %s203
    $region4: #{tpu_custom_call.1} parent=1 // loop_header_branch
      %17 = sbr.rel (%p15) target = $region8
    $region5: #{tpu_custom_call.1} parent=1 // loop_body
      %s19 = ssub.s32 %s14, 1
      %s20 = ssub.s32 %s14, 2
      %s30 = sadd.s32 1, %s23
      %p31 = scmp.ge.s32.totalorder %s30, 1
      %s32 = scalar_select %p31, 0, %s30
      %s33 = sadd.s32 1, %s22
      %s34 = scalar_select %p31, %s33, %s22
      %p35 = scmp.ge.s32.totalorder %s34, 2
      %s36 = scalar_select %p35, 0, %s34
      %s37 = sadd.s32 1, %s21
      %s38 = scalar_select %p35, %s37, %s21
      %p39 = scmp.ge.s32.totalorder %s38, 2
      %s40 = scalar_select %p39, 0, %s38
      %s41 = ssub.s32 %s21, %s40
      %s42 = ssub.s32 %s22, %s36
      %s43 = sor.u32 %s41, %s42
      %p44 = scmp.eq.s32.totalorder %s43, 0
      %s46 = sadd.s32 %s45, 1
      %s47 = scalar_select %p44, %s45, %s46
      %p50 = pneg %p44
      %p51 = scmp.eq.s32.totalorder %s14, 3
      %p52 = por %p50, %p51
      %p53 = scmp.ne.s32.totalorder %s45, %s48
      %p54 = scmp.eq.s32.totalorder %s14, 0
      %p55 = por %p53, %p54
      %p56 = scmp.ne.s32.totalorder %s45, %s48
      %p57 = scmp.eq.s32.totalorder %s19, 3
      %p58 = por %p56, %p57
      %p59 = scmp.ne.s32.totalorder %s48, %s49
      %p60 = scmp.eq.s32.totalorder %s19, 0
      %p61 = por %p59, %p60
      %p62 = scmp.ne.s32.totalorder %s48, %s49
      %p63 = scmp.eq.s32.totalorder %s20, 3
      %p64 = por %p62, %p63
      %p66 = scmp.ne.s32.totalorder %s49, %s65
      %p67 = scmp.eq.s32.totalorder %s20, 0
      %p68 = por %p66, %p67
      %s69 = smul.u32 %s22, 8
      %s70 = ssub.s32 %s69, 1
      %p71 = scmp.gt.s32.totalorder %s70, 0
      %s72 = scalar_select %p71, %s70, 0
      %s73 = smul.u32 %s36, 8
      %s74 = ssub.s32 %s73, 1
      %p75 = scmp.gt.s32.totalorder %s74, 0
      %s76 = scalar_select %p75, %s74, 0
      %s77 = ssub.s32 %s21, %s40
      %s78 = ssub.s32 %s72, %s76
      %s79 = sor.u32 %s77, %s78
      %p80 = scmp.eq.s32.totalorder %s79, 0
      %s82 = sadd.s32 %s81, 1
      %s83 = scalar_select %p80, %s81, %s82
      %p86 = pneg %p80
      %p87 = scmp.eq.s32.totalorder %s14, 3
      %p88 = por %p86, %p87
      %p89 = scmp.ne.s32.totalorder %s81, %s84
      %p90 = scmp.eq.s32.totalorder %s14, 0
      %p91 = por %p89, %p90
      %p92 = scmp.ne.s32.totalorder %s81, %s84
      %p93 = scmp.eq.s32.totalorder %s19, 3
      %p94 = por %p92, %p93
      %p95 = scmp.ne.s32.totalorder %s84, %s85
      %p96 = scmp.eq.s32.totalorder %s19, 0
      %p97 = por %p95, %p96
      %p98 = scmp.ne.s32.totalorder %s84, %s85
      %p99 = scmp.eq.s32.totalorder %s20, 3
      %p100 = por %p98, %p99
      %p102 = scmp.ne.s32.totalorder %s85, %s101
      %p103 = scmp.eq.s32.totalorder %s20, 0
      %p104 = por %p102, %p103
      %s105 = smul.u32 %s22, 8
      %s106 = sadd.s32 %s105, 8
      %p107 = scmp.lt.s32.totalorder %s106, 15
      %s108 = scalar_select %p107, %s106, 15
      %s109 = smul.u32 %s36, 8
      %s110 = sadd.s32 %s109, 8
      %p111 = scmp.lt.s32.totalorder %s110, 15
      %s112 = scalar_select %p111, %s110, 15
      %s113 = ssub.s32 %s21, %s40
      %s114 = ssub.s32 %s108, %s112
      %s115 = sor.u32 %s113, %s114
      %p116 = scmp.eq.s32.totalorder %s115, 0
      %s118 = sadd.s32 %s117, 1
      %s119 = scalar_select %p116, %s117, %s118
      %p122 = pneg %p116
      %p123 = scmp.eq.s32.totalorder %s14, 3
      %p124 = por %p122, %p123
      %p125 = scmp.ne.s32.totalorder %s117, %s120
      %p126 = scmp.eq.s32.totalorder %s14, 0
      %p127 = por %p125, %p126
      %p128 = scmp.ne.s32.totalorder %s117, %s120
      %p129 = scmp.eq.s32.totalorder %s19, 3
      %p130 = por %p128, %p129
      %p131 = scmp.ne.s32.totalorder %s120, %s121
      %p132 = scmp.eq.s32.totalorder %s19, 0
      %p133 = por %p131, %p132
      %p134 = scmp.ne.s32.totalorder %s120, %s121
      %p135 = scmp.eq.s32.totalorder %s20, 3
      %p136 = por %p134, %p135
      %p138 = scmp.ne.s32.totalorder %s121, %s137
      %p139 = scmp.eq.s32.totalorder %s20, 0
      %p140 = por %p138, %p139
      %s141 = ssub.s32 %s23, %s32
      %p142 = scmp.eq.s32.totalorder %s141, 0
      %s144 = sadd.s32 %s143, 1
      %s145 = scalar_select %p142, %s143, %s144
      %p148 = pneg %p142
      %p149 = scmp.eq.s32.totalorder %s14, 3
      %p150 = por %p148, %p149
      %p151 = scmp.ne.s32.totalorder %s143, %s146
      %p152 = scmp.eq.s32.totalorder %s14, 0
      %p153 = por %p151, %p152
      %p154 = scmp.ne.s32.totalorder %s143, %s146
      %p155 = scmp.eq.s32.totalorder %s19, 3
      %p156 = por %p154, %p155
      %p157 = scmp.ne.s32.totalorder %s146, %s147
      %p158 = scmp.eq.s32.totalorder %s19, 0
      %p159 = por %p157, %p158
      %p160 = scmp.ne.s32.totalorder %s146, %s147
      %p161 = scmp.eq.s32.totalorder %s20, 3
      %p162 = por %p160, %p161
      %p164 = scmp.ne.s32.totalorder %s147, %s163
      %p165 = scmp.eq.s32.totalorder %s20, 0
      %p166 = por %p164, %p165
      %s167 = ssub.s32 %s23, %s32
      %p168 = scmp.eq.s32.totalorder %s167, 0
      %s170 = sadd.s32 %s169, 1
      %s171 = scalar_select %p168, %s169, %s170
      %p174 = pneg %p168
      %p175 = scmp.eq.s32.totalorder %s14, 3
      %p176 = por %p174, %p175
      %p177 = scmp.ne.s32.totalorder %s169, %s172
      %p178 = scmp.eq.s32.totalorder %s14, 0
      %p179 = por %p177, %p178
      %p180 = scmp.ne.s32.totalorder %s169, %s172
      %p181 = scmp.eq.s32.totalorder %s19, 3
      %p182 = por %p180, %p181
      %p183 = scmp.ne.s32.totalorder %s172, %s173
      %p184 = scmp.eq.s32.totalorder %s19, 0
      %p185 = por %p183, %p184
      %p186 = scmp.ne.s32.totalorder %s172, %s173
      %p187 = scmp.eq.s32.totalorder %s20, 3
      %p188 = por %p186, %p187
      %p190 = scmp.ne.s32.totalorder %s173, %s189
      %p191 = scmp.eq.s32.totalorder %s20, 0
      %p192 = por %p190, %p191
      %s193 = ssub.s32 %s21, %s40
      %s194 = ssub.s32 %s22, %s36
      %s195 = sor.u32 %s193, %s194
      %s196 = ssub.s32 %s23, %s32
      %s197 = sor.u32 %s195, %s196
      %p198 = scmp.eq.s32.totalorder %s197, 0
      %s200 = sadd.s32 %s199, 1
      %s201 = scalar_select %p198, %s199, %s200
      %p204 = pneg %p198
      %p205 = scmp.eq.s32.totalorder %s14, 3
      %p206 = por %p204, %p205
      %p207 = scmp.ne.s32.totalorder %s199, %s202
      %p208 = scmp.eq.s32.totalorder %s14, 0
      %p209 = por %p207, %p208
      %p210 = scmp.ne.s32.totalorder %s199, %s202
      %p211 = scmp.eq.s32.totalorder %s19, 3
      %p212 = por %p210, %p211
      %p213 = scmp.ne.s32.totalorder %s202, %s203
      %p214 = scmp.eq.s32.totalorder %s19, 0
      %p215 = por %p213, %p214
      %p216 = scmp.ne.s32.totalorder %s202, %s203
      %p217 = scmp.eq.s32.totalorder %s20, 3
      %p218 = por %p216, %p217
      %p220 = scmp.ne.s32.totalorder %s203, %s219
      %p221 = scmp.eq.s32.totalorder %s20, 0
      %p222 = por %p220, %p221
      %p223 = scmp.le.s32.totalorder 1, %s14
      %p224 = scmp.lt.s32.totalorder %s14, 5
      %p225 = pnand %p223, %p224
      %p226 = pneg %p225
      // Predicated region
      $region9: #{tpu_custom_call.1} parent=5 // pred_check
        _
      $region10: #{tpu_custom_call.1} parent=5 // pred_check_branch
        %228 = sbr.rel (%p225) target = $region12
      $region11: #{tpu_custom_call.1} parent=5 // pred_region
        %s229 = ssub.s32 %s14, 1
        // Predicated region
        $region13: #{tpu_custom_call.1} parent=11 // pred_check
          %p230 = pneg %p159
        $region14: #{tpu_custom_call.1} parent=11 // pred_check_branch
          %232 = sbr.rel (%p230) target = $region16
        $region15: #{tpu_custom_call.1} parent=11 // pred_region
          %p233 = scmp.lt.s32.totalorder %s26, 0
          %s234 = scalar_select %p233, %s26, 0
          %s235 = smul.addr %s234, 8
          %s236 = scalar_lea.vmem %s3, %s235
        $region16: #{tpu_custom_call.1} parent=11 // pred_fallthru
          _
        // Predicated region
        $region17: #{tpu_custom_call.1} parent=11 // pred_check
          %p237 = pneg %p185
        $region18: #{tpu_custom_call.1} parent=11 // pred_check_branch
          %239 = sbr.rel (%p237) target = $region20
        $region19: #{tpu_custom_call.1} parent=11 // pred_region
          %p240 = scmp.lt.s32.totalorder %s26, 0
          %s241 = scalar_select %p240, %s26, 0
          %s242 = scalar_lea.vmem %s4, %s241
        $region20: #{tpu_custom_call.1} parent=11 // pred_fallthru
          _
      $region12: #{tpu_custom_call.1} parent=5 // pred_fallthru
        _
      %p243 = scmp.lt.s32.totalorder %s14, 4
      // Predicated region
      $region21: #{tpu_custom_call.1} parent=5 // pred_check
        %p244 = pneg %p243
      $region22: #{tpu_custom_call.1} parent=5 // pred_check_branch
        %246 = sbr.rel (%p244) target = $region24
      $region23: #{tpu_custom_call.1} parent=5 // pred_region
        // Predicated region
        $region25: #{tpu_custom_call.1} parent=23 // pred_check
          %p247 = pneg %p55
        $region26: #{tpu_custom_call.1} parent=23 // pred_check_branch
          %249 = sbr.rel (%p247) target = $region28
        $region27: #{tpu_custom_call.1} parent=23 // pred_region
          %s250 = smul.u32 8, %s22
          %p251 = scmp.lt.s32.totalorder %s21, 1
          %s252 = scalar_select %p251, %s21, 1
          %p253 = scmp.lt.s32.totalorder %s250, 15
          %s254 = scalar_select %p253, %s250, 15
          %s255 = smul.addr %s254, 2
          %s256 = smul.addr %s252, 32
          %s257 = sadd.s32 %s255, %s256
          %s258 = smul.addr %s257, 8
          %s259 = scalar_lea.vmem %s0, %s258
          %s260 = smul.u32 8, %s22
        $region28: #{tpu_custom_call.1} parent=23 // pred_fallthru
          _
        // Predicated region
        $region29: #{tpu_custom_call.1} parent=23 // pred_check
          %p261 = pneg %p91
        $region30: #{tpu_custom_call.1} parent=23 // pred_check_branch
          %263 = sbr.rel (%p261) target = $region32
        $region31: #{tpu_custom_call.1} parent=23 // pred_region
          %s264 = smul.u32 %s22, 8
          %s265 = ssub.s32 %s264, 1
          %p266 = scmp.gt.s32.totalorder %s265, 0
          %s267 = scalar_select %p266, %s265, 0
          %p268 = scmp.lt.s32.totalorder %s21, 1
          %s269 = scalar_select %p268, %s21, 1
          %p270 = scmp.lt.s32.totalorder %s267, 15
          %s271 = scalar_select %p270, %s267, 15
          %s272 = smul.addr %s271, 2
          %s273 = smul.addr %s269, 32
          %s274 = sadd.s32 %s272, %s273
          %s275 = smul.addr %s274, 8
          %s276 = scalar_lea.vmem %s1, %s275
          %s277 = smul.u32 %s22, 8
          %s278 = ssub.s32 %s277, 1
          %p279 = scmp.gt.s32.totalorder %s278, 0
          %s280 = scalar_select %p279, %s278, 0
        $region32: #{tpu_custom_call.1} parent=23 // pred_fallthru
          _
        // Predicated region
        $region33: #{tpu_custom_call.1} parent=23 // pred_check
          %p281 = pneg %p127
        $region34: #{tpu_custom_call.1} parent=23 // pred_check_branch
          %283 = sbr.rel (%p281) target = $region36
        $region35: #{tpu_custom_call.1} parent=23 // pred_region
          %s284 = smul.u32 %s22, 8
          %s285 = sadd.s32 %s284, 8
          %p286 = scmp.lt.s32.totalorder %s285, 15
          %s287 = scalar_select %p286, %s285, 15
          %p288 = scmp.lt.s32.totalorder %s21, 1
          %s289 = scalar_select %p288, %s21, 1
          %p290 = scmp.lt.s32.totalorder %s287, 15
          %s291 = scalar_select %p290, %s287, 15
          %s292 = smul.addr %s291, 2
          %s293 = smul.addr %s289, 32
          %s294 = sadd.s32 %s292, %s293
          %s295 = smul.addr %s294, 8
          %s296 = scalar_lea.vmem %s2, %s295
          %s297 = smul.u32 %s22, 8
          %s298 = sadd.s32 %s297, 8
          %p299 = scmp.lt.s32.totalorder %s298, 15
          %s300 = scalar_select %p299, %s298, 15
        $region36: #{tpu_custom_call.1} parent=23 // pred_fallthru
          _
      $region24: #{tpu_custom_call.1} parent=5 // pred_fallthru
        _
      %p301 = scmp.le.s32.totalorder 1, %s14
      %p302 = scmp.lt.s32.totalorder %s14, 5
      %p303 = pnand %p301, %p302
      %p304 = pneg %p303
      // Predicated region
      $region37: #{tpu_custom_call.1} parent=5 // pred_check
        _
      $region38: #{tpu_custom_call.1} parent=5 // pred_check_branch
        %306 = sbr.rel (%p303) target = $region40
      $region39: #{tpu_custom_call.1} parent=5 // pred_region
        %s307 = ssub.s32 %s14, 1
        %s308 = smul.u32 8, %s25
        %p309 = scmp.lt.s32.totalorder %s24, 1
        %s310 = scalar_select %p309, %s24, 1
        %p311 = scmp.lt.s32.totalorder %s308, 15
        %s312 = scalar_select %p311, %s308, 15
        %s313 = smul.addr %s312, 2
        %s314 = smul.addr %s310, 32
        %s315 = sadd.s32 %s313, %s314
        %s316 = smul.addr %s315, 8
        %s317 = scalar_lea.vmem %s0, %s316
        %p318 = pneg %p61
        %p319 = pneg %p58
        %s320 = smul.u32 %s25, 8
        %s321 = ssub.s32 %s320, 1
        %p322 = scmp.gt.s32.totalorder %s321, 0
        %s323 = scalar_select %p322, %s321, 0
        %p324 = scmp.lt.s32.totalorder %s24, 1
        %s325 = scalar_select %p324, %s24, 1
        %p326 = scmp.lt.s32.totalorder %s323, 15
        %s327 = scalar_select %p326, %s323, 15
        %s328 = smul.addr %s327, 2
        %s329 = smul.addr %s325, 32
        %s330 = sadd.s32 %s328, %s329
        %s331 = smul.addr %s330, 8
        %s332 = scalar_lea.vmem %s1, %s331
        %p333 = pneg %p97
        %p334 = pneg %p94
        %s335 = smul.u32 %s25, 8
        %s336 = sadd.s32 %s335, 8
        %p337 = scmp.lt.s32.totalorder %s336, 15
        %s338 = scalar_select %p337, %s336, 15
        %p339 = scmp.lt.s32.totalorder %s24, 1
        %s340 = scalar_select %p339, %s24, 1
        %p341 = scmp.lt.s32.totalorder %s338, 15
        %s342 = scalar_select %p341, %s338, 15
        %s343 = smul.addr %s342, 2
        %s344 = smul.addr %s340, 32
        %s345 = sadd.s32 %s343, %s344
        %s346 = smul.addr %s345, 8
        %s347 = scalar_lea.vmem %s2, %s346
        %p348 = pneg %p133
        %p349 = pneg %p130
        %p350 = scmp.lt.s32.totalorder %s26, 0
        %s351 = scalar_select %p350, %s26, 0
        %s352 = smul.addr %s351, 8
        %s353 = scalar_lea.vmem %s3, %s352
        %p354 = pneg %p159
        %p355 = pneg %p156
        %p356 = scmp.lt.s32.totalorder %s26, 0
        %s357 = scalar_select %p356, %s26, 0
        %s358 = scalar_lea.vmem %s4, %s357
        %p359 = pneg %p185
        %p360 = pneg %p182
        %p361 = pneg %p215
        %p362 = pneg %p212
        %s363 = sand.u32 %s202, 1
        %s364 = scalar_lea.sflag [#allocation5], %s363
        %s365 = sand.u32 %s202, 1
        %s366 = smul.addr %s365, 128
        %s367 = scalar_lea.vmem [#allocation4], %s366
        %s368 = smul.u32 8, %s25
        %p369 = scmp.lt.s32.totalorder %s24, 1
        %s370 = scalar_select %p369, %s24, 1
        %p371 = scmp.lt.s32.totalorder %s368, 15
        %s372 = scalar_select %p371, %s368, 15
        %s373 = smul.addr %s372, 2
        %s374 = smul.addr %s370, 32
        %s375 = sadd.s32 %s373, %s374
        %s376 = smul.addr %s375, 8
        %s377 = scalar_lea.vmem %s0, %s376
        %s378 = smul.u32 8, %s25
        %s379 = smul.u32 %s25, 8
        %s380 = ssub.s32 %s379, 1
        %p381 = scmp.gt.s32.totalorder %s380, 0
        %s382 = scalar_select %p381, %s380, 0
        %p383 = scmp.lt.s32.totalorder %s24, 1
        %s384 = scalar_select %p383, %s24, 1
        %p385 = scmp.lt.s32.totalorder %s382, 15
        %s386 = scalar_select %p385, %s382, 15
        %s387 = smul.addr %s386, 2
        %s388 = smul.addr %s384, 32
        %s389 = sadd.s32 %s387, %s388
        %s390 = smul.addr %s389, 8
        %s391 = scalar_lea.vmem %s1, %s390
        %s392 = smul.u32 %s25, 8
        %s393 = ssub.s32 %s392, 1
        %p394 = scmp.gt.s32.totalorder %s393, 0
        %s395 = scalar_select %p394, %s393, 0
        %s396 = smul.u32 %s25, 8
        %s397 = sadd.s32 %s396, 8
        %p398 = scmp.lt.s32.totalorder %s397, 15
        %s399 = scalar_select %p398, %s397, 15
        %p400 = scmp.lt.s32.totalorder %s24, 1
        %s401 = scalar_select %p400, %s24, 1
        %p402 = scmp.lt.s32.totalorder %s399, 15
        %s403 = scalar_select %p402, %s399, 15
        %s404 = smul.addr %s403, 2
        %s405 = smul.addr %s401, 32
        %s406 = sadd.s32 %s404, %s405
        %s407 = smul.addr %s406, 8
        %s408 = scalar_lea.vmem %s2, %s407
        %s409 = smul.u32 %s25, 8
        %s410 = sadd.s32 %s409, 8
        %p411 = scmp.lt.s32.totalorder %s410, 15
        %s412 = scalar_select %p411, %s410, 15
        %p413 = scmp.lt.s32.totalorder %s26, 0
        %s414 = scalar_select %p413, %s26, 0
        %s415 = smul.addr %s414, 8
        %s416 = scalar_lea.vmem %s3, %s415
        %p417 = scmp.lt.s32.totalorder %s26, 0
        %s418 = scalar_select %p417, %s26, 0
        %s419 = scalar_lea.vmem %s4, %s418
        %s420 = smul.u32 8, %s25
        %p421 = scmp.eq.s32.totalorder %s26, 0
        // Predicated region
        $region41: #{tpu_custom_call.1} parent=39 // pred_check
          %p422 = pneg %p421
        $region42: #{tpu_custom_call.1} parent=39 // pred_check_branch
          %424 = sbr.rel (%p422) target = $region44
        $region43: #{tpu_custom_call.1} parent=39 // pred_region
          %vm425 = vcmask 23552
          %426 = vst.msk [vmem:[#allocation2] sm:$0xff] %vm425, 0.0
          %427 = vst.msk [vmem:[#allocation2 + $0x8] sm:$0xff] %vm425, 0.0
          %vm428 = vcmask 17408
          %429 = vst.msk [vmem:[#allocation2 + $0x10] sm:$0x3] %vm428, 0.0
          %430 = vst.msk [vmem:[#allocation2 + $0x18] sm:$0xff] %vm425, 0.0
          %431 = vst.msk [vmem:[#allocation2 + $0x20] sm:$0xff] %vm425, 0.0
          %432 = vst.msk [vmem:[#allocation2 + $0x28] sm:$0x3] %vm428, 0.0
          %433 = vst.msk [vmem:[#allocation2 + $0x30] sm:$0xff] %vm425, 0.0
          %434 = vst.msk [vmem:[#allocation2 + $0x38] sm:$0xff] %vm425, 0.0
          %435 = vst.msk [vmem:[#allocation2 + $0x40] sm:$0x3] %vm428, 0.0
          %436 = vst.msk [vmem:[#allocation2 + $0x48] sm:$0xff] %vm425, 0.0
          %437 = vst.msk [vmem:[#allocation2 + $0x50] sm:$0xff] %vm425, 0.0
          %438 = vst.msk [vmem:[#allocation2 + $0x58] sm:$0x3] %vm428, 0.0
          %439 = vst.msk [vmem:[#allocation2 + $0x60] sm:$0xff] %vm425, 0.0
          %440 = vst.msk [vmem:[#allocation2 + $0x68] sm:$0xff] %vm425, 0.0
          %441 = vst.msk [vmem:[#allocation2 + $0x70] sm:$0x3] %vm428, 0.0
          %442 = vst.msk [vmem:[#allocation2 + $0x78] sm:$0xff] %vm425, 0.0
          %443 = vst.msk [vmem:[#allocation2 + $0x80] sm:$0xff] %vm425, 0.0
          %444 = vst.msk [vmem:[#allocation2 + $0x88] sm:$0x3] %vm428, 0.0
          %445 = vst.msk [vmem:[#allocation2 + $0x90] sm:$0xff] %vm425, 0.0
          %446 = vst.msk [vmem:[#allocation2 + $0x98] sm:$0xff] %vm425, 0.0
          %447 = vst.msk [vmem:[#allocation2 + $0xa0] sm:$0x3] %vm428, 0.0
          %448 = vst.msk [vmem:[#allocation2 + $0xa8] sm:$0xff] %vm425, 0.0
          %449 = vst.msk [vmem:[#allocation2 + $0xb0] sm:$0xff] %vm425, 0.0
          %450 = vst.msk [vmem:[#allocation2 + $0xb8] sm:$0x3] %vm428, 0.0
          %451 = vst.msk [vmem:[#allocation2 + $0xc0] sm:$0xff] %vm425, 0.0
          %452 = vst.msk [vmem:[#allocation2 + $0xc8] sm:$0xff] %vm425, 0.0
          %453 = vst.msk [vmem:[#allocation2 + $0xd0] sm:$0x3] %vm428, 0.0
          %454 = vst.msk [vmem:[#allocation2 + $0xd8] sm:$0xff] %vm425, 0.0
          %455 = vst.msk [vmem:[#allocation2 + $0xe0] sm:$0xff] %vm425, 0.0
          %456 = vst.msk [vmem:[#allocation2 + $0xe8] sm:$0x3] %vm428, 0.0
          %v457 = vld [vmem:[%s377] sm:$0xff]
          %v458 = vld [vmem:[%s377 + $0x8] sm:$0xff]
          %v459 = vld [vmem:[%s377 + $0x10] sm:$0xff]
          %v460 = vld [vmem:[%s377 + $0x18] sm:$0xff]
          %v461 = vld [vmem:[%s377 + $0x20] sm:$0xff]
          %v462 = vld [vmem:[%s377 + $0x28] sm:$0xff]
          %v463 = vld [vmem:[%s377 + $0x30] sm:$0xff]
          %v464 = vld [vmem:[%s377 + $0x38] sm:$0xff]
          %v465 = vld [vmem:[%s377 + $0x40] sm:$0xff]
          %v466 = vld [vmem:[%s377 + $0x48] sm:$0xff]
          %v467 = vld [vmem:[%s377 + $0x50] sm:$0xff]
          %v468 = vld [vmem:[%s377 + $0x58] sm:$0xff]
          %v469 = vld [vmem:[%s377 + $0x60] sm:$0xff]
          %v470 = vld [vmem:[%s377 + $0x68] sm:$0xff]
          %v471 = vld [vmem:[%s377 + $0x70] sm:$0xff]
          %v472 = vld [vmem:[%s377 + $0x78] sm:$0xff]
          %s473 = scalar_lea.vmem [#allocation2], 24
          %474 = vst.msk [vmem:[%s473 + $0x1] sm:$0xff] %vm425, %v457
          %475 = vst.msk [vmem:[%s473 + $0x9] sm:$0xff] %vm425, %v458
          %476 = vst.msk [vmem:[%s473 + $0x19] sm:$0xff] %vm425, %v459
          %477 = vst.msk [vmem:[%s473 + $0x21] sm:$0xff] %vm425, %v460
          %478 = vst.msk [vmem:[%s473 + $0x31] sm:$0xff] %vm425, %v461
          %479 = vst.msk [vmem:[%s473 + $0x39] sm:$0xff] %vm425, %v462
          %480 = vst.msk [vmem:[%s473 + $0x49] sm:$0xff] %vm425, %v463
          %481 = vst.msk [vmem:[%s473 + $0x51] sm:$0xff] %vm425, %v464
          %482 = vst.msk [vmem:[%s473 + $0x61] sm:$0xff] %vm425, %v465
          %483 = vst.msk [vmem:[%s473 + $0x69] sm:$0xff] %vm425, %v466
          %484 = vst.msk [vmem:[%s473 + $0x79] sm:$0xff] %vm425, %v467
          %485 = vst.msk [vmem:[%s473 + $0x81] sm:$0xff] %vm425, %v468
          %486 = vst.msk [vmem:[%s473 + $0x91] sm:$0xff] %vm425, %v469
          %487 = vst.msk [vmem:[%s473 + $0x99] sm:$0xff] %vm425, %v470
          %488 = vst.msk [vmem:[%s473 + $0xa9] sm:$0xff] %vm425, %v471
          %489 = vst.msk [vmem:[%s473 + $0xb1] sm:$0xff] %vm425, %v472
          %p490 = scmp.gt.s32.totalorder %s25, 0
          // Predicated region
          $region45: #{tpu_custom_call.1} parent=43 // pred_check
            %p491 = pneg %p490
          $region46: #{tpu_custom_call.1} parent=43 // pred_check_branch
            %493 = sbr.rel (%p491) target = $region48
          $region47: #{tpu_custom_call.1} parent=43 // pred_region
            %v494 = vld [vmem:[%s391] sm:$0xff]
            %v495 = vld [vmem:[%s391 + $0x8] sm:$0xff]
            %496 = vst.msk [vmem:[#allocation2 + $0x1] sm:$0xff] %vm425, %v494
            %497 = vst.msk [vmem:[#allocation2 + $0x9] sm:$0xff] %vm425, %v495
          $region48: #{tpu_custom_call.1} parent=43 // pred_fallthru
            _
          %p498 = scmp.lt.s32.totalorder %s25, 1
          // Predicated region
          $region49: #{tpu_custom_call.1} parent=43 // pred_check
            %p499 = pneg %p498
          $region50: #{tpu_custom_call.1} parent=43 // pred_check_branch
            %501 = sbr.rel (%p499) target = $region52
          $region51: #{tpu_custom_call.1} parent=43 // pred_region
            %v502 = vld [vmem:[%s408] sm:$0xff]
            %v503 = vld [vmem:[%s408 + $0x8] sm:$0xff]
            %s504 = scalar_lea.vmem [#allocation2], 216
            %505 = vst.msk [vmem:[%s504 + $0x1] sm:$0xff] %vm425, %v502
            %506 = vst.msk [vmem:[%s504 + $0x9] sm:$0xff] %vm425, %v503
          $region52: #{tpu_custom_call.1} parent=43 // pred_fallthru
            _
          %v507 = vld [vmem:[#allocation2] sm:$0xff]
          %v508 = vld [vmem:[#allocation2 + $0x8] sm:$0xff]
          %v509 = vld [vmem:[#allocation2 + $0x18] sm:$0xff]
          %v510 = vld [vmem:[#allocation2 + $0x20] sm:$0xff]
          %v511 = vld [vmem:[#allocation2 + $0x30] sm:$0xff]
          %v512 = vld [vmem:[#allocation2 + $0x38] sm:$0xff]
          %v513 = vld [vmem:[#allocation2 + $0x48] sm:$0xff]
          %v514 = vld [vmem:[#allocation2 + $0x50] sm:$0xff]
          %v515 = vld [vmem:[#allocation2 + $0x60] sm:$0xff]
          %v516 = vld [vmem:[#allocation2 + $0x68] sm:$0xff]
          %v517 = vld [vmem:[#allocation2 + $0x78] sm:$0xff]
          %v518 = vld [vmem:[#allocation2 + $0x80] sm:$0xff]
          %v519 = vld [vmem:[#allocation2 + $0x90] sm:$0xff]
          %v520 = vld [vmem:[#allocation2 + $0x98] sm:$0xff]
          %v521 = vld [vmem:[#allocation2 + $0xa8] sm:$0xff]
          %v522 = vld [vmem:[#allocation2 + $0xb0] sm:$0xff]
          %523 = vst.msk [vmem:[#allocation3] sm:$0xff] %vm425, %v507
          %524 = vst.msk [vmem:[#allocation3 + $0x8] sm:$0xff] %vm425, %v508
          %525 = vst.msk [vmem:[#allocation3 + $0x10] sm:$0xff] %vm425, %v509
          %526 = vst.msk [vmem:[#allocation3 + $0x18] sm:$0xff] %vm425, %v510
          %527 = vst.msk [vmem:[#allocation3 + $0x20] sm:$0xff] %vm425, %v511
          %528 = vst.msk [vmem:[#allocation3 + $0x28] sm:$0xff] %vm425, %v512
          %529 = vst.msk [vmem:[#allocation3 + $0x30] sm:$0xff] %vm425, %v513
          %530 = vst.msk [vmem:[#allocation3 + $0x38] sm:$0xff] %vm425, %v514
          %531 = vst.msk [vmem:[#allocation3 + $0x40] sm:$0xff] %vm425, %v515
          %532 = vst.msk [vmem:[#allocation3 + $0x48] sm:$0xff] %vm425, %v516
          %533 = vst.msk [vmem:[#allocation3 + $0x50] sm:$0xff] %vm425, %v517
          %534 = vst.msk [vmem:[#allocation3 + $0x58] sm:$0xff] %vm425, %v518
          %535 = vst.msk [vmem:[#allocation3 + $0x60] sm:$0xff] %vm425, %v519
          %536 = vst.msk [vmem:[#allocation3 + $0x68] sm:$0xff] %vm425, %v520
          %537 = vst.msk [vmem:[#allocation3 + $0x70] sm:$0xff] %vm425, %v521
          %538 = vst.msk [vmem:[#allocation3 + $0x78] sm:$0xff] %vm425, %v522
          %v539 = vld [vmem:[#allocation2 + $0x1] sm:$0xff]
          %v540 = vld [vmem:[#allocation2 + $0x9] sm:$0xff]
          %v541 = vld [vmem:[#allocation2 + $0x19] sm:$0xff]
          %v542 = vld [vmem:[#allocation2 + $0x21] sm:$0xff]
          %v543 = vld [vmem:[#allocation2 + $0x31] sm:$0xff]
          %v544 = vld [vmem:[#allocation2 + $0x39] sm:$0xff]
          %v545 = vld [vmem:[#allocation2 + $0x49] sm:$0xff]
          %v546 = vld [vmem:[#allocation2 + $0x51] sm:$0xff]
          %v547 = vld [vmem:[#allocation2 + $0x61] sm:$0xff]
          %v548 = vld [vmem:[#allocation2 + $0x69] sm:$0xff]
          %v549 = vld [vmem:[#allocation2 + $0x79] sm:$0xff]
          %v550 = vld [vmem:[#allocation2 + $0x81] sm:$0xff]
          %v551 = vld [vmem:[#allocation2 + $0x91] sm:$0xff]
          %v552 = vld [vmem:[#allocation2 + $0x99] sm:$0xff]
          %v553 = vld [vmem:[#allocation2 + $0xa9] sm:$0xff]
          %v554 = vld [vmem:[#allocation2 + $0xb1] sm:$0xff]
          %571 = vrot.lane.b32.xlu0 %v539, 3
          %v572 = vpop.permute.xlu0 %571
          %573 = vrot.lane.b32.xlu0 %v540, 3
          %v574 = vpop.permute.xlu0 %573
          %575 = vrot.lane.b32.xlu0 %v541, 3
          %v576 = vpop.permute.xlu0 %575
          %577 = vrot.lane.b32.xlu0 %v542, 3
          %v578 = vpop.permute.xlu0 %577
          %579 = vrot.lane.b32.xlu0 %v543, 3
          %v580 = vpop.permute.xlu0 %579
          %581 = vrot.lane.b32.xlu0 %v544, 3
          %v582 = vpop.permute.xlu0 %581
          %583 = vrot.lane.b32.xlu0 %v545, 3
          %v584 = vpop.permute.xlu0 %583
          %585 = vrot.lane.b32.xlu0 %v546, 3
          %v586 = vpop.permute.xlu0 %585
          %587 = vrot.lane.b32.xlu0 %v547, 3
          %v588 = vpop.permute.xlu0 %587
          %589 = vrot.lane.b32.xlu0 %v548, 3
          %v590 = vpop.permute.xlu0 %589
          %591 = vrot.lane.b32.xlu0 %v549, 3
          %v592 = vpop.permute.xlu0 %591
          %593 = vrot.lane.b32.xlu0 %v550, 3
          %v594 = vpop.permute.xlu0 %593
          %595 = vrot.lane.b32.xlu0 %v551, 3
          %v596 = vpop.permute.xlu0 %595
          %597 = vrot.lane.b32.xlu0 %v552, 3
          %v598 = vpop.permute.xlu0 %597
          %599 = vrot.lane.b32.xlu0 %v553, 3
          %v600 = vpop.permute.xlu0 %599
          %601 = vrot.lane.b32.xlu0 %v554, 3
          %v602 = vpop.permute.xlu0 %601
          %vm619 = vcmask 48152
          %620 = vst.msk [vmem:[#allocation3] sm:$0xff] %vm619, %v572
          %621 = vst.msk [vmem:[#allocation3 + $0x8] sm:$0xff] %vm619, %v574
          %622 = vst.msk [vmem:[#allocation3 + $0x10] sm:$0xff] %vm619, %v576
          %623 = vst.msk [vmem:[#allocation3 + $0x18] sm:$0xff] %vm619, %v578
          %624 = vst.msk [vmem:[#allocation3 + $0x20] sm:$0xff] %vm619, %v580
          %625 = vst.msk [vmem:[#allocation3 + $0x28] sm:$0xff] %vm619, %v582
          %626 = vst.msk [vmem:[#allocation3 + $0x30] sm:$0xff] %vm619, %v584
          %627 = vst.msk [vmem:[#allocation3 + $0x38] sm:$0xff] %vm619, %v586
          %628 = vst.msk [vmem:[#allocation3 + $0x40] sm:$0xff] %vm619, %v588
          %629 = vst.msk [vmem:[#allocation3 + $0x48] sm:$0xff] %vm619, %v590
          %630 = vst.msk [vmem:[#allocation3 + $0x50] sm:$0xff] %vm619, %v592
          %631 = vst.msk [vmem:[#allocation3 + $0x58] sm:$0xff] %vm619, %v594
          %632 = vst.msk [vmem:[#allocation3 + $0x60] sm:$0xff] %vm619, %v596
          %633 = vst.msk [vmem:[#allocation3 + $0x68] sm:$0xff] %vm619, %v598
          %634 = vst.msk [vmem:[#allocation3 + $0x70] sm:$0xff] %vm619, %v600
          %635 = vst.msk [vmem:[#allocation3 + $0x78] sm:$0xff] %vm619, %v602
          %v636 = vld [vmem:[#allocation2 + $0x2] sm:$0xff]
          %v637 = vld [vmem:[#allocation2 + $0xa] sm:$0xff]
          %v638 = vld [vmem:[#allocation2 + $0x1a] sm:$0xff]
          %v639 = vld [vmem:[#allocation2 + $0x22] sm:$0xff]
          %v640 = vld [vmem:[#allocation2 + $0x32] sm:$0xff]
          %v641 = vld [vmem:[#allocation2 + $0x3a] sm:$0xff]
          %v642 = vld [vmem:[#allocation2 + $0x4a] sm:$0xff]
          %v643 = vld [vmem:[#allocation2 + $0x52] sm:$0xff]
          %v644 = vld [vmem:[#allocation2 + $0x62] sm:$0xff]
          %v645 = vld [vmem:[#allocation2 + $0x6a] sm:$0xff]
          %v646 = vld [vmem:[#allocation2 + $0x7a] sm:$0xff]
          %v647 = vld [vmem:[#allocation2 + $0x82] sm:$0xff]
          %v648 = vld [vmem:[#allocation2 + $0x92] sm:$0xff]
          %v649 = vld [vmem:[#allocation2 + $0x9a] sm:$0xff]
          %v650 = vld [vmem:[#allocation2 + $0xaa] sm:$0xff]
          %v651 = vld [vmem:[#allocation2 + $0xb2] sm:$0xff]
          %668 = vrot.lane.b32.xlu0 %v636, 6
          %v669 = vpop.permute.xlu0 %668
          %670 = vrot.lane.b32.xlu0 %v637, 6
          %v671 = vpop.permute.xlu0 %670
          %672 = vrot.lane.b32.xlu0 %v638, 6
          %v673 = vpop.permute.xlu0 %672
          %674 = vrot.lane.b32.xlu0 %v639, 6
          %v675 = vpop.permute.xlu0 %674
          %676 = vrot.lane.b32.xlu0 %v640, 6
          %v677 = vpop.permute.xlu0 %676
          %678 = vrot.lane.b32.xlu0 %v641, 6
          %v679 = vpop.permute.xlu0 %678
          %680 = vrot.lane.b32.xlu0 %v642, 6
          %v681 = vpop.permute.xlu0 %680
          %682 = vrot.lane.b32.xlu0 %v643, 6
          %v683 = vpop.permute.xlu0 %682
          %684 = vrot.lane.b32.xlu0 %v644, 6
          %v685 = vpop.permute.xlu0 %684
          %686 = vrot.lane.b32.xlu0 %v645, 6
          %v687 = vpop.permute.xlu0 %686
          %688 = vrot.lane.b32.xlu0 %v646, 6
          %v689 = vpop.permute.xlu0 %688
          %690 = vrot.lane.b32.xlu0 %v647, 6
          %v691 = vpop.permute.xlu0 %690
          %692 = vrot.lane.b32.xlu0 %v648, 6
          %v693 = vpop.permute.xlu0 %692
          %694 = vrot.lane.b32.xlu0 %v649, 6
          %v695 = vpop.permute.xlu0 %694
          %696 = vrot.lane.b32.xlu0 %v650, 6
          %v697 = vpop.permute.xlu0 %696
          %698 = vrot.lane.b32.xlu0 %v651, 6
          %v699 = vpop.permute.xlu0 %698
          %vm716 = vcmask 72752
          %717 = vst.msk [vmem:[#allocation3] sm:$0xff] %vm716, %v669
          %718 = vst.msk [vmem:[#allocation3 + $0x8] sm:$0xff] %vm716, %v671
          %719 = vst.msk [vmem:[#allocation3 + $0x10] sm:$0xff] %vm716, %v673
          %720 = vst.msk [vmem:[#allocation3 + $0x18] sm:$0xff] %vm716, %v675
          %721 = vst.msk [vmem:[#allocation3 + $0x20] sm:$0xff] %vm716, %v677
          %722 = vst.msk [vmem:[#allocation3 + $0x28] sm:$0xff] %vm716, %v679
          %723 = vst.msk [vmem:[#allocation3 + $0x30] sm:$0xff] %vm716, %v681
          %724 = vst.msk [vmem:[#allocation3 + $0x38] sm:$0xff] %vm716, %v683
          %725 = vst.msk [vmem:[#allocation3 + $0x40] sm:$0xff] %vm716, %v685
          %726 = vst.msk [vmem:[#allocation3 + $0x48] sm:$0xff] %vm716, %v687
          %727 = vst.msk [vmem:[#allocation3 + $0x50] sm:$0xff] %vm716, %v689
          %728 = vst.msk [vmem:[#allocation3 + $0x58] sm:$0xff] %vm716, %v691
          %729 = vst.msk [vmem:[#allocation3 + $0x60] sm:$0xff] %vm716, %v693
          %730 = vst.msk [vmem:[#allocation3 + $0x68] sm:$0xff] %vm716, %v695
          %731 = vst.msk [vmem:[#allocation3 + $0x70] sm:$0xff] %vm716, %v697
          %732 = vst.msk [vmem:[#allocation3 + $0x78] sm:$0xff] %vm716, %v699
          %v733 = vld [vmem:[%s473] sm:$0xff]
          %v734 = vld [vmem:[%s473 + $0x8] sm:$0xff]
          %v735 = vld [vmem:[%s473 + $0x18] sm:$0xff]
          %v736 = vld [vmem:[%s473 + $0x20] sm:$0xff]
          %v737 = vld [vmem:[%s473 + $0x30] sm:$0xff]
          %v738 = vld [vmem:[%s473 + $0x38] sm:$0xff]
          %v739 = vld [vmem:[%s473 + $0x48] sm:$0xff]
          %v740 = vld [vmem:[%s473 + $0x50] sm:$0xff]
          %v741 = vld [vmem:[%s473 + $0x60] sm:$0xff]
          %v742 = vld [vmem:[%s473 + $0x68] sm:$0xff]
          %v743 = vld [vmem:[%s473 + $0x78] sm:$0xff]
          %v744 = vld [vmem:[%s473 + $0x80] sm:$0xff]
          %v745 = vld [vmem:[%s473 + $0x90] sm:$0xff]
          %v746 = vld [vmem:[%s473 + $0x98] sm:$0xff]
          %v747 = vld [vmem:[%s473 + $0xa8] sm:$0xff]
          %v748 = vld [vmem:[%s473 + $0xb0] sm:$0xff]
          %765 = vrot.lane.b32.xlu0 %v733, 9
          %v766 = vpop.permute.xlu0 %765
          %767 = vrot.lane.b32.xlu0 %v734, 9
          %v768 = vpop.permute.xlu0 %767
          %769 = vrot.lane.b32.xlu0 %v735, 9
          %v770 = vpop.permute.xlu0 %769
          %771 = vrot.lane.b32.xlu0 %v736, 9
          %v772 = vpop.permute.xlu0 %771
          %773 = vrot.lane.b32.xlu0 %v737, 9
          %v774 = vpop.permute.xlu0 %773
          %775 = vrot.lane.b32.xlu0 %v738, 9
          %v776 = vpop.permute.xlu0 %775
          %777 = vrot.lane.b32.xlu0 %v739, 9
          %v778 = vpop.permute.xlu0 %777
          %779 = vrot.lane.b32.xlu0 %v740, 9
          %v780 = vpop.permute.xlu0 %779
          %781 = vrot.lane.b32.xlu0 %v741, 9
          %v782 = vpop.permute.xlu0 %781
          %783 = vrot.lane.b32.xlu0 %v742, 9
          %v784 = vpop.permute.xlu0 %783
          %785 = vrot.lane.b32.xlu0 %v743, 9
          %v786 = vpop.permute.xlu0 %785
          %787 = vrot.lane.b32.xlu0 %v744, 9
          %v788 = vpop.permute.xlu0 %787
          %789 = vrot.lane.b32.xlu0 %v745, 9
          %v790 = vpop.permute.xlu0 %789
          %791 = vrot.lane.b32.xlu0 %v746, 9
          %v792 = vpop.permute.xlu0 %791
          %793 = vrot.lane.b32.xlu0 %v747, 9
          %v794 = vpop.permute.xlu0 %793
          %795 = vrot.lane.b32.xlu0 %v748, 9
          %v796 = vpop.permute.xlu0 %795
          %vm813 = vcmask 97352
          %814 = vst.msk [vmem:[#allocation3] sm:$0xff] %vm813, %v766
          %815 = vst.msk [vmem:[#allocation3 + $0x8] sm:$0xff] %vm813, %v768
          %816 = vst.msk [vmem:[#allocation3 + $0x10] sm:$0xff] %vm813, %v770
          %817 = vst.msk [vmem:[#allocation3 + $0x18] sm:$0xff] %vm813, %v772
          %818 = vst.msk [vmem:[#allocation3 + $0x20] sm:$0xff] %vm813, %v774
          %819 = vst.msk [vmem:[#allocation3 + $0x28] sm:$0xff] %vm813, %v776
          %820 = vst.msk [vmem:[#allocation3 + $0x30] sm:$0xff] %vm813, %v778
          %821 = vst.msk [vmem:[#allocation3 + $0x38] sm:$0xff] %vm813, %v780
          %822 = vst.msk [vmem:[#allocation3 + $0x40] sm:$0xff] %vm813, %v782
          %823 = vst.msk [vmem:[#allocation3 + $0x48] sm:$0xff] %vm813, %v784
          %824 = vst.msk [vmem:[#allocation3 + $0x50] sm:$0xff] %vm813, %v786
          %825 = vst.msk [vmem:[#allocation3 + $0x58] sm:$0xff] %vm813, %v788
          %826 = vst.msk [vmem:[#allocation3 + $0x60] sm:$0xff] %vm813, %v790
          %827 = vst.msk [vmem:[#allocation3 + $0x68] sm:$0xff] %vm813, %v792
          %828 = vst.msk [vmem:[#allocation3 + $0x70] sm:$0xff] %vm813, %v794
          %829 = vst.msk [vmem:[#allocation3 + $0x78] sm:$0xff] %vm813, %v796
          %v830 = vld [vmem:[%s473 + $0x1] sm:$0xff]
          %v831 = vld [vmem:[%s473 + $0x9] sm:$0xff]
          %v832 = vld [vmem:[%s473 + $0x19] sm:$0xff]
          %v833 = vld [vmem:[%s473 + $0x21] sm:$0xff]
          %v834 = vld [vmem:[%s473 + $0x31] sm:$0xff]
          %v835 = vld [vmem:[%s473 + $0x39] sm:$0xff]
          %v836 = vld [vmem:[%s473 + $0x49] sm:$0xff]
          %v837 = vld [vmem:[%s473 + $0x51] sm:$0xff]
          %v838 = vld [vmem:[%s473 + $0x61] sm:$0xff]
          %v839 = vld [vmem:[%s473 + $0x69] sm:$0xff]
          %v840 = vld [vmem:[%s473 + $0x79] sm:$0xff]
          %v841 = vld [vmem:[%s473 + $0x81] sm:$0xff]
          %v842 = vld [vmem:[%s473 + $0x91] sm:$0xff]
          %v843 = vld [vmem:[%s473 + $0x99] sm:$0xff]
          %v844 = vld [vmem:[%s473 + $0xa9] sm:$0xff]
          %v845 = vld [vmem:[%s473 + $0xb1] sm:$0xff]
          %862 = vrot.lane.b32.xlu0 %v830, 12
          %v863 = vpop.permute.xlu0 %862
          %864 = vrot.lane.b32.xlu0 %v831, 12
          %v865 = vpop.permute.xlu0 %864
          %866 = vrot.lane.b32.xlu0 %v832, 12
          %v867 = vpop.permute.xlu0 %866
          %868 = vrot.lane.b32.xlu0 %v833, 12
          %v869 = vpop.permute.xlu0 %868
          %870 = vrot.lane.b32.xlu0 %v834, 12
          %v871 = vpop.permute.xlu0 %870
          %872 = vrot.lane.b32.xlu0 %v835, 12
          %v873 = vpop.permute.xlu0 %872
          %874 = vrot.lane.b32.xlu0 %v836, 12
          %v875 = vpop.permute.xlu0 %874
          %876 = vrot.lane.b32.xlu0 %v837, 12
          %v877 = vpop.permute.xlu0 %876
          %878 = vrot.lane.b32.xlu0 %v838, 12
          %v879 = vpop.permute.xlu0 %878
          %880 = vrot.lane.b32.xlu0 %v839, 12
          %v881 = vpop.permute.xlu0 %880
          %882 = vrot.lane.b32.xlu0 %v840, 12
          %v883 = vpop.permute.xlu0 %882
          %884 = vrot.lane.b32.xlu0 %v841, 12
          %v885 = vpop.permute.xlu0 %884
          %886 = vrot.lane.b32.xlu0 %v842, 12
          %v887 = vpop.permute.xlu0 %886
          %888 = vrot.lane.b32.xlu0 %v843, 12
          %v889 = vpop.permute.xlu0 %888
          %890 = vrot.lane.b32.xlu0 %v844, 12
          %v891 = vpop.permute.xlu0 %890
          %892 = vrot.lane.b32.xlu0 %v845, 12
          %v893 = vpop.permute.xlu0 %892
          %vm910 = vcmask 121952
          %911 = vst.msk [vmem:[#allocation3] sm:$0xff] %vm910, %v863
          %912 = vst.msk [vmem:[#allocation3 + $0x8] sm:$0xff] %vm910, %v865
          %913 = vst.msk [vmem:[#allocation3 + $0x10] sm:$0xff] %vm910, %v867
          %914 = vst.msk [vmem:[#allocation3 + $0x18] sm:$0xff] %vm910, %v869
          %915 = vst.msk [vmem:[#allocation3 + $0x20] sm:$0xff] %vm910, %v871
          %916 = vst.msk [vmem:[#allocation3 + $0x28] sm:$0xff] %vm910, %v873
          %917 = vst.msk [vmem:[#allocation3 + $0x30] sm:$0xff] %vm910, %v875
          %918 = vst.msk [vmem:[#allocation3 + $0x38] sm:$0xff] %vm910, %v877
          %919 = vst.msk [vmem:[#allocation3 + $0x40] sm:$0xff] %vm910, %v879
          %920 = vst.msk [vmem:[#allocation3 + $0x48] sm:$0xff] %vm910, %v881
          %921 = vst.msk [vmem:[#allocation3 + $0x50] sm:$0xff] %vm910, %v883
          %922 = vst.msk [vmem:[#allocation3 + $0x58] sm:$0xff] %vm910, %v885
          %923 = vst.msk [vmem:[#allocation3 + $0x60] sm:$0xff] %vm910, %v887
          %924 = vst.msk [vmem:[#allocation3 + $0x68] sm:$0xff] %vm910, %v889
          %925 = vst.msk [vmem:[#allocation3 + $0x70] sm:$0xff] %vm910, %v891
          %926 = vst.msk [vmem:[#allocation3 + $0x78] sm:$0xff] %vm910, %v893
          %v927 = vld [vmem:[%s473 + $0x2] sm:$0xff]
          %v928 = vld [vmem:[%s473 + $0xa] sm:$0xff]
          %v929 = vld [vmem:[%s473 + $0x1a] sm:$0xff]
          %v930 = vld [vmem:[%s473 + $0x22] sm:$0xff]
          %v931 = vld [vmem:[%s473 + $0x32] sm:$0xff]
          %v932 = vld [vmem:[%s473 + $0x3a] sm:$0xff]
          %v933 = vld [vmem:[%s473 + $0x4a] sm:$0xff]
          %v934 = vld [vmem:[%s473 + $0x52] sm:$0xff]
          %v935 = vld [vmem:[%s473 + $0x62] sm:$0xff]
          %v936 = vld [vmem:[%s473 + $0x6a] sm:$0xff]
          %v937 = vld [vmem:[%s473 + $0x7a] sm:$0xff]
          %v938 = vld [vmem:[%s473 + $0x82] sm:$0xff]
          %v939 = vld [vmem:[%s473 + $0x92] sm:$0xff]
          %v940 = vld [vmem:[%s473 + $0x9a] sm:$0xff]
          %v941 = vld [vmem:[%s473 + $0xaa] sm:$0xff]
          %v942 = vld [vmem:[%s473 + $0xb2] sm:$0xff]
          %959 = vrot.lane.b32.xlu0 %v927, 15
          %v960 = vpop.permute.xlu0 %959
          %961 = vrot.lane.b32.xlu0 %v928, 15
          %v962 = vpop.permute.xlu0 %961
          %963 = vrot.lane.b32.xlu0 %v929, 15
          %v964 = vpop.permute.xlu0 %963
          %965 = vrot.lane.b32.xlu0 %v930, 15
          %v966 = vpop.permute.xlu0 %965
          %967 = vrot.lane.b32.xlu0 %v931, 15
          %v968 = vpop.permute.xlu0 %967
          %969 = vrot.lane.b32.xlu0 %v932, 15
          %v970 = vpop.permute.xlu0 %969
          %971 = vrot.lane.b32.xlu0 %v933, 15
          %v972 = vpop.permute.xlu0 %971
          %973 = vrot.lane.b32.xlu0 %v934, 15
          %v974 = vpop.permute.xlu0 %973
          %975 = vrot.lane.b32.xlu0 %v935, 15
          %v976 = vpop.permute.xlu0 %975
          %977 = vrot.lane.b32.xlu0 %v936, 15
          %v978 = vpop.permute.xlu0 %977
          %979 = vrot.lane.b32.xlu0 %v937, 15
          %v980 = vpop.permute.xlu0 %979
          %981 = vrot.lane.b32.xlu0 %v938, 15
          %v982 = vpop.permute.xlu0 %981
          %983 = vrot.lane.b32.xlu0 %v939, 15
          %v984 = vpop.permute.xlu0 %983
          %985 = vrot.lane.b32.xlu0 %v940, 15
          %v986 = vpop.permute.xlu0 %985
          %987 = vrot.lane.b32.xlu0 %v941, 15
          %v988 = vpop.permute.xlu0 %987
          %989 = vrot.lane.b32.xlu0 %v942, 15
          %v990 = vpop.permute.xlu0 %989
          %vm1007 = vcmask 146552
          %1008 = vst.msk [vmem:[#allocation3] sm:$0xff] %vm1007, %v960
          %1009 = vst.msk [vmem:[#allocation3 + $0x8] sm:$0xff] %vm1007, %v962
          %1010 = vst.msk [vmem:[#allocation3 + $0x10] sm:$0xff] %vm1007, %v964
          %1011 = vst.msk [vmem:[#allocation3 + $0x18] sm:$0xff] %vm1007, %v966
          %1012 = vst.msk [vmem:[#allocation3 + $0x20] sm:$0xff] %vm1007, %v968
          %1013 = vst.msk [vmem:[#allocation3 + $0x28] sm:$0xff] %vm1007, %v970
          %1014 = vst.msk [vmem:[#allocation3 + $0x30] sm:$0xff] %vm1007, %v972
          %1015 = vst.msk [vmem:[#allocation3 + $0x38] sm:$0xff] %vm1007, %v974
          %1016 = vst.msk [vmem:[#allocation3 + $0x40] sm:$0xff] %vm1007, %v976
          %1017 = vst.msk [vmem:[#allocation3 + $0x48] sm:$0xff] %vm1007, %v978
          %1018 = vst.msk [vmem:[#allocation3 + $0x50] sm:$0xff] %vm1007, %v980
          %1019 = vst.msk [vmem:[#allocation3 + $0x58] sm:$0xff] %vm1007, %v982
          %1020 = vst.msk [vmem:[#allocation3 + $0x60] sm:$0xff] %vm1007, %v984
          %1021 = vst.msk [vmem:[#allocation3 + $0x68] sm:$0xff] %vm1007, %v986
          %1022 = vst.msk [vmem:[#allocation3 + $0x70] sm:$0xff] %vm1007, %v988
          %1023 = vst.msk [vmem:[#allocation3 + $0x78] sm:$0xff] %vm1007, %v990
          %s1024 = scalar_lea.vmem [#allocation2], 48
          %v1025 = vld [vmem:[%s1024] sm:$0xff]
          %v1026 = vld [vmem:[%s1024 + $0x8] sm:$0xff]
          %v1027 = vld [vmem:[%s1024 + $0x18] sm:$0xff]
          %v1028 = vld [vmem:[%s1024 + $0x20] sm:$0xff]
          %v1029 = vld [vmem:[%s1024 + $0x30] sm:$0xff]
          %v1030 = vld [vmem:[%s1024 + $0x38] sm:$0xff]
          %v1031 = vld [vmem:[%s1024 + $0x48] sm:$0xff]
          %v1032 = vld [vmem:[%s1024 + $0x50] sm:$0xff]
          %v1033 = vld [vmem:[%s1024 + $0x60] sm:$0xff]
          %v1034 = vld [vmem:[%s1024 + $0x68] sm:$0xff]
          %v1035 = vld [vmem:[%s1024 + $0x78] sm:$0xff]
          %v1036 = vld [vmem:[%s1024 + $0x80] sm:$0xff]
          %v1037 = vld [vmem:[%s1024 + $0x90] sm:$0xff]
          %v1038 = vld [vmem:[%s1024 + $0x98] sm:$0xff]
          %v1039 = vld [vmem:[%s1024 + $0xa8] sm:$0xff]
          %v1040 = vld [vmem:[%s1024 + $0xb0] sm:$0xff]
          %1057 = vrot.lane.b32.xlu0 %v1025, 18
          %v1058 = vpop.permute.xlu0 %1057
          %1059 = vrot.lane.b32.xlu0 %v1026, 18
          %v1060 = vpop.permute.xlu0 %1059
          %1061 = vrot.lane.b32.xlu0 %v1027, 18
          %v1062 = vpop.permute.xlu0 %1061
          %1063 = vrot.lane.b32.xlu0 %v1028, 18
          %v1064 = vpop.permute.xlu0 %1063
          %1065 = vrot.lane.b32.xlu0 %v1029, 18
          %v1066 = vpop.permute.xlu0 %1065
          %1067 = vrot.lane.b32.xlu0 %v1030, 18
          %v1068 = vpop.permute.xlu0 %1067
          %1069 = vrot.lane.b32.xlu0 %v1031, 18
          %v1070 = vpop.permute.xlu0 %1069
          %1071 = vrot.lane.b32.xlu0 %v1032, 18
          %v1072 = vpop.permute.xlu0 %1071
          %1073 = vrot.lane.b32.xlu0 %v1033, 18
          %v1074 = vpop.permute.xlu0 %1073
          %1075 = vrot.lane.b32.xlu0 %v1034, 18
          %v1076 = vpop.permute.xlu0 %1075
          %1077 = vrot.lane.b32.xlu0 %v1035, 18
          %v1078 = vpop.permute.xlu0 %1077
          %1079 = vrot.lane.b32.xlu0 %v1036, 18
          %v1080 = vpop.permute.xlu0 %1079
          %1081 = vrot.lane.b32.xlu0 %v1037, 18
          %v1082 = vpop.permute.xlu0 %1081
          %1083 = vrot.lane.b32.xlu0 %v1038, 18
          %v1084 = vpop.permute.xlu0 %1083
          %1085 = vrot.lane.b32.xlu0 %v1039, 18
          %v1086 = vpop.permute.xlu0 %1085
          %1087 = vrot.lane.b32.xlu0 %v1040, 18
          %v1088 = vpop.permute.xlu0 %1087
          %vm1105 = vcmask 171152
          %1106 = vst.msk [vmem:[#allocation3] sm:$0xff] %vm1105, %v1058
          %1107 = vst.msk [vmem:[#allocation3 + $0x8] sm:$0xff] %vm1105, %v1060
          %1108 = vst.msk [vmem:[#allocation3 + $0x10] sm:$0xff] %vm1105, %v1062
          %1109 = vst.msk [vmem:[#allocation3 + $0x18] sm:$0xff] %vm1105, %v1064
          %1110 = vst.msk [vmem:[#allocation3 + $0x20] sm:$0xff] %vm1105, %v1066
          %1111 = vst.msk [vmem:[#allocation3 + $0x28] sm:$0xff] %vm1105, %v1068
          %1112 = vst.msk [vmem:[#allocation3 + $0x30] sm:$0xff] %vm1105, %v1070
          %1113 = vst.msk [vmem:[#allocation3 + $0x38] sm:$0xff] %vm1105, %v1072
          %1114 = vst.msk [vmem:[#allocation3 + $0x40] sm:$0xff] %vm1105, %v1074
          %1115 = vst.msk [vmem:[#allocation3 + $0x48] sm:$0xff] %vm1105, %v1076
          %1116 = vst.msk [vmem:[#allocation3 + $0x50] sm:$0xff] %vm1105, %v1078
          %1117 = vst.msk [vmem:[#allocation3 + $0x58] sm:$0xff] %vm1105, %v1080
          %1118 = vst.msk [vmem:[#allocation3 + $0x60] sm:$0xff] %vm1105, %v1082
          %1119 = vst.msk [vmem:[#allocation3 + $0x68] sm:$0xff] %vm1105, %v1084
          %1120 = vst.msk [vmem:[#allocation3 + $0x70] sm:$0xff] %vm1105, %v1086
          %1121 = vst.msk [vmem:[#allocation3 + $0x78] sm:$0xff] %vm1105, %v1088
          %v1122 = vld [vmem:[%s1024 + $0x1] sm:$0xff]
          %v1123 = vld [vmem:[%s1024 + $0x9] sm:$0xff]
          %v1124 = vld [vmem:[%s1024 + $0x19] sm:$0xff]
          %v1125 = vld [vmem:[%s1024 + $0x21] sm:$0xff]
          %v1126 = vld [vmem:[%s1024 + $0x31] sm:$0xff]
          %v1127 = vld [vmem:[%s1024 + $0x39] sm:$0xff]
          %v1128 = vld [vmem:[%s1024 + $0x49] sm:$0xff]
          %v1129 = vld [vmem:[%s1024 + $0x51] sm:$0xff]
          %v1130 = vld [vmem:[%s1024 + $0x61] sm:$0xff]
          %v1131 = vld [vmem:[%s1024 + $0x69] sm:$0xff]
          %v1132 = vld [vmem:[%s1024 + $0x79] sm:$0xff]
          %v1133 = vld [vmem:[%s1024 + $0x81] sm:$0xff]
          %v1134 = vld [vmem:[%s1024 + $0x91] sm:$0xff]
          %v1135 = vld [vmem:[%s1024 + $0x99] sm:$0xff]
          %v1136 = vld [vmem:[%s1024 + $0xa9] sm:$0xff]
          %v1137 = vld [vmem:[%s1024 + $0xb1] sm:$0xff]
          %1154 = vrot.lane.b32.xlu0 %v1122, 21
          %v1155 = vpop.permute.xlu0 %1154
          %1156 = vrot.lane.b32.xlu0 %v1123, 21
          %v1157 = vpop.permute.xlu0 %1156
          %1158 = vrot.lane.b32.xlu0 %v1124, 21
          %v1159 = vpop.permute.xlu0 %1158
          %1160 = vrot.lane.b32.xlu0 %v1125, 21
          %v1161 = vpop.permute.xlu0 %1160
          %1162 = vrot.lane.b32.xlu0 %v1126, 21
          %v1163 = vpop.permute.xlu0 %1162
          %1164 = vrot.lane.b32.xlu0 %v1127, 21
          %v1165 = vpop.permute.xlu0 %1164
          %1166 = vrot.lane.b32.xlu0 %v1128, 21
          %v1167 = vpop.permute.xlu0 %1166
          %1168 = vrot.lane.b32.xlu0 %v1129, 21
          %v1169 = vpop.permute.xlu0 %1168
          %1170 = vrot.lane.b32.xlu0 %v1130, 21
          %v1171 = vpop.permute.xlu0 %1170
          %1172 = vrot.lane.b32.xlu0 %v1131, 21
          %v1173 = vpop.permute.xlu0 %1172
          %1174 = vrot.lane.b32.xlu0 %v1132, 21
          %v1175 = vpop.permute.xlu0 %1174
          %1176 = vrot.lane.b32.xlu0 %v1133, 21
          %v1177 = vpop.permute.xlu0 %1176
          %1178 = vrot.lane.b32.xlu0 %v1134, 21
          %v1179 = vpop.permute.xlu0 %1178
          %1180 = vrot.lane.b32.xlu0 %v1135, 21
          %v1181 = vpop.permute.xlu0 %1180
          %1182 = vrot.lane.b32.xlu0 %v1136, 21
          %v1183 = vpop.permute.xlu0 %1182
          %1184 = vrot.lane.b32.xlu0 %v1137, 21
          %v1185 = vpop.permute.xlu0 %1184
          %vm1202 = vcmask 195752
          %1203 = vst.msk [vmem:[#allocation3] sm:$0xff] %vm1202, %v1155
          %1204 = vst.msk [vmem:[#allocation3 + $0x8] sm:$0xff] %vm1202, %v1157
          %1205 = vst.msk [vmem:[#allocation3 + $0x10] sm:$0xff] %vm1202, %v1159
          %1206 = vst.msk [vmem:[#allocation3 + $0x18] sm:$0xff] %vm1202, %v1161
          %1207 = vst.msk [vmem:[#allocation3 + $0x20] sm:$0xff] %vm1202, %v1163
          %1208 = vst.msk [vmem:[#allocation3 + $0x28] sm:$0xff] %vm1202, %v1165
          %1209 = vst.msk [vmem:[#allocation3 + $0x30] sm:$0xff] %vm1202, %v1167
          %1210 = vst.msk [vmem:[#allocation3 + $0x38] sm:$0xff] %vm1202, %v1169
          %1211 = vst.msk [vmem:[#allocation3 + $0x40] sm:$0xff] %vm1202, %v1171
          %1212 = vst.msk [vmem:[#allocation3 + $0x48] sm:$0xff] %vm1202, %v1173
          %1213 = vst.msk [vmem:[#allocation3 + $0x50] sm:$0xff] %vm1202, %v1175
          %1214 = vst.msk [vmem:[#allocation3 + $0x58] sm:$0xff] %vm1202, %v1177
          %1215 = vst.msk [vmem:[#allocation3 + $0x60] sm:$0xff] %vm1202, %v1179
          %1216 = vst.msk [vmem:[#allocation3 + $0x68] sm:$0xff] %vm1202, %v1181
          %1217 = vst.msk [vmem:[#allocation3 + $0x70] sm:$0xff] %vm1202, %v1183
          %1218 = vst.msk [vmem:[#allocation3 + $0x78] sm:$0xff] %vm1202, %v1185
          %v1219 = vld [vmem:[%s1024 + $0x2] sm:$0xff]
          %v1220 = vld [vmem:[%s1024 + $0xa] sm:$0xff]
          %v1221 = vld [vmem:[%s1024 + $0x1a] sm:$0xff]
          %v1222 = vld [vmem:[%s1024 + $0x22] sm:$0xff]
          %v1223 = vld [vmem:[%s1024 + $0x32] sm:$0xff]
          %v1224 = vld [vmem:[%s1024 + $0x3a] sm:$0xff]
          %v1225 = vld [vmem:[%s1024 + $0x4a] sm:$0xff]
          %v1226 = vld [vmem:[%s1024 + $0x52] sm:$0xff]
          %v1227 = vld [vmem:[%s1024 + $0x62] sm:$0xff]
          %v1228 = vld [vmem:[%s1024 + $0x6a] sm:$0xff]
          %v1229 = vld [vmem:[%s1024 + $0x7a] sm:$0xff]
          %v1230 = vld [vmem:[%s1024 + $0x82] sm:$0xff]
          %v1231 = vld [vmem:[%s1024 + $0x92] sm:$0xff]
          %v1232 = vld [vmem:[%s1024 + $0x9a] sm:$0xff]
          %v1233 = vld [vmem:[%s1024 + $0xaa] sm:$0xff]
          %v1234 = vld [vmem:[%s1024 + $0xb2] sm:$0xff]
          %1251 = vrot.lane.b32.xlu0 %v1219, 24
          %v1252 = vpop.permute.xlu0 %1251
          %1253 = vrot.lane.b32.xlu0 %v1220, 24
          %v1254 = vpop.permute.xlu0 %1253
          %1255 = vrot.lane.b32.xlu0 %v1221, 24
          %v1256 = vpop.permute.xlu0 %1255
          %1257 = vrot.lane.b32.xlu0 %v1222, 24
          %v1258 = vpop.permute.xlu0 %1257
          %1259 = vrot.lane.b32.xlu0 %v1223, 24
          %v1260 = vpop.permute.xlu0 %1259
          %1261 = vrot.lane.b32.xlu0 %v1224, 24
          %v1262 = vpop.permute.xlu0 %1261
          %1263 = vrot.lane.b32.xlu0 %v1225, 24
          %v1264 = vpop.permute.xlu0 %1263
          %1265 = vrot.lane.b32.xlu0 %v1226, 24
          %v1266 = vpop.permute.xlu0 %1265
          %1267 = vrot.lane.b32.xlu0 %v1227, 24
          %v1268 = vpop.permute.xlu0 %1267
          %1269 = vrot.lane.b32.xlu0 %v1228, 24
          %v1270 = vpop.permute.xlu0 %1269
          %1271 = vrot.lane.b32.xlu0 %v1229, 24
          %v1272 = vpop.permute.xlu0 %1271
          %1273 = vrot.lane.b32.xlu0 %v1230, 24
          %v1274 = vpop.permute.xlu0 %1273
          %1275 = vrot.lane.b32.xlu0 %v1231, 24
          %v1276 = vpop.permute.xlu0 %1275
          %1277 = vrot.lane.b32.xlu0 %v1232, 24
          %v1278 = vpop.permute.xlu0 %1277
          %1279 = vrot.lane.b32.xlu0 %v1233, 24
          %v1280 = vpop.permute.xlu0 %1279
          %1281 = vrot.lane.b32.xlu0 %v1234, 24
          %v1282 = vpop.permute.xlu0 %1281
          %vm1299 = vcmask 220352
          %1300 = vst.msk [vmem:[#allocation3] sm:$0xff] %vm1299, %v1252
          %1301 = vst.msk [vmem:[#allocation3 + $0x8] sm:$0xff] %vm1299, %v1254
          %1302 = vst.msk [vmem:[#allocation3 + $0x10] sm:$0xff] %vm1299, %v1256
          %1303 = vst.msk [vmem:[#allocation3 + $0x18] sm:$0xff] %vm1299, %v1258
          %1304 = vst.msk [vmem:[#allocation3 + $0x20] sm:$0xff] %vm1299, %v1260
          %1305 = vst.msk [vmem:[#allocation3 + $0x28] sm:$0xff] %vm1299, %v1262
          %1306 = vst.msk [vmem:[#allocation3 + $0x30] sm:$0xff] %vm1299, %v1264
          %1307 = vst.msk [vmem:[#allocation3 + $0x38] sm:$0xff] %vm1299, %v1266
          %1308 = vst.msk [vmem:[#allocation3 + $0x40] sm:$0xff] %vm1299, %v1268
          %1309 = vst.msk [vmem:[#allocation3 + $0x48] sm:$0xff] %vm1299, %v1270
          %1310 = vst.msk [vmem:[#allocation3 + $0x50] sm:$0xff] %vm1299, %v1272
          %1311 = vst.msk [vmem:[#allocation3 + $0x58] sm:$0xff] %vm1299, %v1274
          %1312 = vst.msk [vmem:[#allocation3 + $0x60] sm:$0xff] %vm1299, %v1276
          %1313 = vst.msk [vmem:[#allocation3 + $0x68] sm:$0xff] %vm1299, %v1278
          %1314 = vst.msk [vmem:[#allocation3 + $0x70] sm:$0xff] %vm1299, %v1280
          %1315 = vst.msk [vmem:[#allocation3 + $0x78] sm:$0xff] %vm1299, %v1282
        $region44: #{tpu_custom_call.1} parent=39 // pred_fallthru
          _
        %v1316 = vld [vmem:[#allocation3] sm:$0xff]
        %v1317 = vld [vmem:[#allocation3 + $0x8] sm:$0xff]
        %v1318 = vld [vmem:[#allocation3 + $0x10] sm:$0xff]
        %v1319 = vld [vmem:[#allocation3 + $0x18] sm:$0xff]
        %v1320 = vld [vmem:[#allocation3 + $0x20] sm:$0xff]
        %v1321 = vld [vmem:[#allocation3 + $0x28] sm:$0xff]
        %v1322 = vld [vmem:[#allocation3 + $0x30] sm:$0xff]
        %v1323 = vld [vmem:[#allocation3 + $0x38] sm:$0xff]
        %v1324 = vld [vmem:[#allocation3 + $0x40] sm:$0xff]
        %v1325 = vld [vmem:[#allocation3 + $0x48] sm:$0xff]
        %v1326 = vld [vmem:[#allocation3 + $0x50] sm:$0xff]
        %v1327 = vld [vmem:[#allocation3 + $0x58] sm:$0xff]
        %v1328 = vld [vmem:[#allocation3 + $0x60] sm:$0xff]
        %v1329 = vld [vmem:[#allocation3 + $0x68] sm:$0xff]
        %v1330 = vld [vmem:[#allocation3 + $0x70] sm:$0xff]
        %v1331 = vld [vmem:[#allocation3 + $0x78] sm:$0xff]
        %v1332 = vld [vmem:[%s416] sm:$0xff]
        %v1333 = vld [vmem:[%s416 + $0x8] sm:$0xff]
        %v1334 = vld [vmem:[%s416 + $0x10] sm:$0xff]
        %v1335 = vld [vmem:[%s416 + $0x18] sm:$0x7]
        %v1336 = vld [vmem:[%s419] sm:$0x1]
        %v1338 = vlaneseq
        %v1339 = vshrl.u32 %v1338, 7
        %v1340 = vsub.s32 0, %v1339
        %v1341 = vrot.slane %v1336, %v1340
        %vm1343 = vcmask 220160
        %v1345 = vsel %vm1343, %v1316, 0
        %v1348 = vsel %vm1343, %v1317, 0
        %v1351 = vsel %vm1343, %v1318, 0
        %v1354 = vsel %vm1343, %v1319, 0
        %v1357 = vsel %vm1343, %v1320, 0
        %v1360 = vsel %vm1343, %v1321, 0
        %v1363 = vsel %vm1343, %v1322, 0
        %v1366 = vsel %vm1343, %v1323, 0
        %v1369 = vsel %vm1343, %v1324, 0
        %v1372 = vsel %vm1343, %v1325, 0
        %v1375 = vsel %vm1343, %v1326, 0
        %v1378 = vsel %vm1343, %v1327, 0
        %v1381 = vsel %vm1343, %v1328, 0
        %v1384 = vsel %vm1343, %v1329, 0
        %v1387 = vsel %vm1343, %v1330, 0
        %v1390 = vsel %vm1343, %v1331, 0
        %vm1392 = vcmask 1042432
        %v1394 = vsel %vm1392, %v1335, 0
        %1396 = vmatprep.subr.mxu0 0.0
        %1397 = vmatpush1.msra.mxu0 0.0
        %1398 = vmatprep.subr.mxu0 0.0
        %1399 = vmatpush1.msra.mxu0 0.0
        %1400 = vmatprep.subr.mxu0 0.0
        %1401 = vmatpush1.msra.mxu0 0.0
        %1402 = vmatprep.subr.mxu0 0.0
        %1403 = vmatpush1.msra.mxu0 0.0
        %1404 = vmatprep.subr.mxu0 0.0
        %1405 = vmatpush1.msra.mxu0 0.0
        %1406 = vmatprep.subr.mxu0 0.0
        %1407 = vmatpush1.msra.mxu0 0.0
        %1408 = vmatprep.subr.mxu0 0.0
        %1409 = vmatpush1.msra.mxu0 0.0
        %1410 = vmatprep.subr.mxu0 0.0
        %1411 = vmatpush1.msra.mxu0 0.0
        %1412 = vmatprep.subr.mxu0 0.0
        %1413 = vmatpush1.msra.mxu0 0.0
        %1414 = vmatprep.subr.mxu0 0.0
        %1415 = vmatpush1.msra.mxu0 0.0
        %1416 = vmatprep.subr.mxu0 0.0
        %1417 = vmatpush1.msra.mxu0 0.0
        %1418 = vmatprep.subr.mxu0 0.0
        %1419 = vmatpush1.msra.mxu0 0.0
        %1420 = vmatprep.subr.mxu0 0.0
        %1421 = vmatpush1.msra.mxu0 %v1394
        %1422 = vmatprep.subr.mxu0 0.0
        %1423 = vmatpush1.msra.mxu0 %v1334
        %1424 = vmatprep.subr.mxu0 0.0
        %1425 = vmatpush1.msra.mxu0 %v1333
        %1426 = vmatprep.subr.mxu0 0.0
        %1427 = vmatpush1.msra.mxu0 %v1332
        %1428 = vmatprep.subr.mxu0 0.0
        %1429 = vmatpush2.msra.mxu0 0.0
        %1430 = vmatprep.subr.mxu0 0.0
        %1431 = vmatpush2.msra.mxu0 0.0
        %1432 = vmatprep.subr.mxu0 0.0
        %1433 = vmatpush2.msra.mxu0 0.0
        %1434 = vmatprep.subr.mxu0 0.0
        %1435 = vmatpush2.msra.mxu0 0.0
        %1436 = vmatprep.subr.mxu0 0.0
        %1437 = vmatpush2.msra.mxu0 0.0
        %1438 = vmatprep.subr.mxu0 0.0
        %1439 = vmatpush2.msra.mxu0 0.0
        %1440 = vmatprep.subr.mxu0 0.0
        %1441 = vmatpush2.msra.mxu0 0.0
        %1442 = vmatprep.subr.mxu0 0.0
        %1443 = vmatpush2.msra.mxu0 0.0
        %1444 = vmatprep.subr.mxu0 0.0
        %1445 = vmatpush2.msra.mxu0 0.0
        %1446 = vmatprep.subr.mxu0 0.0
        %1447 = vmatpush2.msra.mxu0 0.0
        %1448 = vmatprep.subr.mxu0 0.0
        %1449 = vmatpush2.msra.mxu0 0.0
        %1450 = vmatprep.subr.mxu0 0.0
        %1451 = vmatpush2.msra.mxu0 0.0
        %1452 = vmatprep.subr.mxu0 0.0
        %1453 = vmatpush2.msra.mxu0 0.0
        %1454 = vmatprep.subr.mxu0 0.0
        %1455 = vmatpush2.msra.mxu0 0.0
        %1456 = vmatprep.subr.mxu0 0.0
        %1457 = vmatpush2.msra.mxu0 0.0
        %1458 = vmatprep.subr.mxu0 0.0
        %1459 = vmatpush2.msra.mxu0 0.0
        %1460 = vmatprep.mubr.f32.mxu0 0.0
        %1461 = vmatmul.mubr.f32.gmra.mxu0 %v1345
        %v1462 = vpop.f32.mrf.mxu0
        %v1463 = vadd.f32 %v1341, %v1462
        %v1464 = vpop.f32.mrf.mxu0
        %1465 = vmatprep.mubr.f32.mxu0 0.0
        %1466 = vmatmul.mubr.f32.gmra.mxu0 %v1348
        %v1467 = vpop.f32.mrf.mxu0
        %v1468 = vadd.f32 %v1341, %v1467
        %v1469 = vpop.f32.mrf.mxu0
        %1470 = vmatprep.mubr.f32.mxu0 0.0
        %1471 = vmatmul.mubr.f32.gmra.mxu0 %v1351
        %v1472 = vpop.f32.mrf.mxu0
        %v1473 = vadd.f32 %v1341, %v1472
        %v1474 = vpop.f32.mrf.mxu0
        %1475 = vmatprep.mubr.f32.mxu0 0.0
        %1476 = vmatmul.mubr.f32.gmra.mxu0 %v1354
        %v1477 = vpop.f32.mrf.mxu0
        %v1478 = vadd.f32 %v1341, %v1477
        %v1479 = vpop.f32.mrf.mxu0
        %1480 = vmatprep.mubr.f32.mxu0 0.0
        %1481 = vmatmul.mubr.f32.gmra.mxu0 %v1357
        %v1482 = vpop.f32.mrf.mxu0
        %v1483 = vadd.f32 %v1341, %v1482
        %v1484 = vpop.f32.mrf.mxu0
        %1485 = vmatprep.mubr.f32.mxu0 0.0
        %1486 = vmatmul.mubr.f32.gmra.mxu0 %v1360
        %v1487 = vpop.f32.mrf.mxu0
        %v1488 = vadd.f32 %v1341, %v1487
        %v1489 = vpop.f32.mrf.mxu0
        %1490 = vmatprep.mubr.f32.mxu0 0.0
        %1491 = vmatmul.mubr.f32.gmra.mxu0 %v1363
        %v1492 = vpop.f32.mrf.mxu0
        %v1493 = vadd.f32 %v1341, %v1492
        %v1494 = vpop.f32.mrf.mxu0
        %1495 = vmatprep.mubr.f32.mxu0 0.0
        %1496 = vmatmul.mubr.f32.gmra.mxu0 %v1366
        %v1497 = vpop.f32.mrf.mxu0
        %v1498 = vadd.f32 %v1341, %v1497
        %v1499 = vpop.f32.mrf.mxu0
        %1500 = vmatprep.mubr.f32.mxu0 0.0
        %1501 = vmatmul.mubr.f32.gmra.mxu0 %v1369
        %v1502 = vpop.f32.mrf.mxu0
        %v1503 = vadd.f32 %v1341, %v1502
        %v1504 = vpop.f32.mrf.mxu0
        %1505 = vmatprep.mubr.f32.mxu0 0.0
        %1506 = vmatmul.mubr.f32.gmra.mxu0 %v1372
        %v1507 = vpop.f32.mrf.mxu0
        %v1508 = vadd.f32 %v1341, %v1507
        %v1509 = vpop.f32.mrf.mxu0
        %1510 = vmatprep.mubr.f32.mxu0 0.0
        %1511 = vmatmul.mubr.f32.gmra.mxu0 %v1375
        %v1512 = vpop.f32.mrf.mxu0
        %v1513 = vadd.f32 %v1341, %v1512
        %v1514 = vpop.f32.mrf.mxu0
        %1515 = vmatprep.mubr.f32.mxu0 0.0
        %1516 = vmatmul.mubr.f32.gmra.mxu0 %v1378
        %v1517 = vpop.f32.mrf.mxu0
        %v1518 = vadd.f32 %v1341, %v1517
        %v1519 = vpop.f32.mrf.mxu0
        %1520 = vmatprep.mubr.f32.mxu0 0.0
        %1521 = vmatmul.mubr.f32.gmra.mxu0 %v1381
        %v1522 = vpop.f32.mrf.mxu0
        %v1523 = vadd.f32 %v1341, %v1522
        %v1524 = vpop.f32.mrf.mxu0
        %1525 = vmatprep.mubr.f32.mxu0 0.0
        %1526 = vmatmul.mubr.f32.gmra.mxu0 %v1384
        %v1527 = vpop.f32.mrf.mxu0
        %v1528 = vadd.f32 %v1341, %v1527
        %v1529 = vpop.f32.mrf.mxu0
        %1530 = vmatprep.mubr.f32.mxu0 0.0
        %1531 = vmatmul.mubr.f32.gmra.mxu0 %v1387
        %v1532 = vpop.f32.mrf.mxu0
        %v1533 = vadd.f32 %v1341, %v1532
        %v1534 = vpop.f32.mrf.mxu0
        %1535 = vmatprep.mubr.f32.mxu0 0.0
        %1536 = vmatmul.mubr.f32.gmra.mxu0 %v1390
        %v1537 = vpop.f32.mrf.mxu0
        %v1538 = vadd.f32 %v1341, %v1537
        %v1539 = vpop.f32.mrf.mxu0
        %1540 = vdwg.mxu0
        %v1541 = vmax.f32 %v1463, 0.0
        %v1542 = vmax.f32 %v1468, 0.0
        %v1543 = vmax.f32 %v1473, 0.0
        %v1544 = vmax.f32 %v1478, 0.0
        %v1545 = vmax.f32 %v1483, 0.0
        %v1546 = vmax.f32 %v1488, 0.0
        %v1547 = vmax.f32 %v1493, 0.0
        %v1548 = vmax.f32 %v1498, 0.0
        %v1549 = vmax.f32 %v1503, 0.0
        %v1550 = vmax.f32 %v1508, 0.0
        %v1551 = vmax.f32 %v1513, 0.0
        %v1552 = vmax.f32 %v1518, 0.0
        %v1553 = vmax.f32 %v1523, 0.0
        %v1554 = vmax.f32 %v1528, 0.0
        %v1555 = vmax.f32 %v1533, 0.0
        %v1556 = vmax.f32 %v1538, 0.0
        %vm1557 = vcmask 523264
        %1558 = vst.msk [vmem:[%s367] sm:$0xff] %vm1557, %v1541
        %1559 = vst.msk [vmem:[%s367 + $0x8] sm:$0xff] %vm1557, %v1542
        %1560 = vst.msk [vmem:[%s367 + $0x10] sm:$0xff] %vm1557, %v1543
        %1561 = vst.msk [vmem:[%s367 + $0x18] sm:$0xff] %vm1557, %v1544
        %1562 = vst.msk [vmem:[%s367 + $0x20] sm:$0xff] %vm1557, %v1545
        %1563 = vst.msk [vmem:[%s367 + $0x28] sm:$0xff] %vm1557, %v1546
        %1564 = vst.msk [vmem:[%s367 + $0x30] sm:$0xff] %vm1557, %v1547
        %1565 = vst.msk [vmem:[%s367 + $0x38] sm:$0xff] %vm1557, %v1548
        %1566 = vst.msk [vmem:[%s367 + $0x40] sm:$0xff] %vm1557, %v1549
        %1567 = vst.msk [vmem:[%s367 + $0x48] sm:$0xff] %vm1557, %v1550
        %1568 = vst.msk [vmem:[%s367 + $0x50] sm:$0xff] %vm1557, %v1551
        %1569 = vst.msk [vmem:[%s367 + $0x58] sm:$0xff] %vm1557, %v1552
        %1570 = vst.msk [vmem:[%s367 + $0x60] sm:$0xff] %vm1557, %v1553
        %1571 = vst.msk [vmem:[%s367 + $0x68] sm:$0xff] %vm1557, %v1554
        %1572 = vst.msk [vmem:[%s367 + $0x70] sm:$0xff] %vm1557, %v1555
        %1573 = vst.msk [vmem:[%s367 + $0x78] sm:$0xff] %vm1557, %v1556
        %s1574 = sand.u32 %s202, 1
        %s1575 = scalar_lea.sflag [#allocation5], %s1574
        %s1576 = sand.u32 %s202, 1
        %s1577 = smul.addr %s1576, 128
        %s1578 = scalar_lea.vmem [#allocation4], %s1577
        // Predicated region
        $region53: #{tpu_custom_call.1} parent=39 // pred_check
          %p1579 = pneg %p212
        $region54: #{tpu_custom_call.1} parent=39 // pred_check_branch
          %1581 = sbr.rel (%p1579) target = $region56
        $region55: #{tpu_custom_call.1} parent=39 // pred_region
          %s1582 = smul.u32 8, %s25
          %s1584 = ssub.s32 2048, 2048
          %1585 = vsyncadd %s1575, %s1584
          %s1586 = smul.addr %s1582, 2
          %s1587 = sadd.s32 %s26, %s1586
          %s1588 = smul.addr %s24, 32
          %s1589 = sadd.s32 %s1587, %s1588
          %s1590 = smul.addr %s1589, 128
          %s1591 = scalar_lea.hbm %s5, %s1590
          %s1592 = sshll.u32 %s1578, 4
          %s1593 = int_to_ptr.vmem [resolvable:$true] %s1592
          %1598 = dma.vmem_to_hbm [thread:$0]  %s1593, 2048, %s1591, %s1575, 128, 128, 8
        $region56: #{tpu_custom_call.1} parent=39 // pred_fallthru
          _
      $region40: #{tpu_custom_call.1} parent=5 // pred_fallthru
        _
      %p1599 = scmp.le.s32.totalorder 2, %s14
      // Predicated region
      $region57: #{tpu_custom_call.1} parent=5 // pred_check
        %p1600 = pneg %p1599
      $region58: #{tpu_custom_call.1} parent=5 // pred_check_branch
        %1602 = sbr.rel (%p1600) target = $region60
      $region59: #{tpu_custom_call.1} parent=5 // pred_region
        %s1603 = ssub.s32 %s14, 2
        // Predicated region
        $region61: #{tpu_custom_call.1} parent=59 // pred_check
          %p1604 = pneg %p218
        $region62: #{tpu_custom_call.1} parent=59 // pred_check_branch
          %1606 = sbr.rel (%p1604) target = $region64
        $region63: #{tpu_custom_call.1} parent=59 // pred_region
          %s1607 = sand.u32 %s203, 1
          %s1608 = scalar_lea.sflag [#allocation5], %s1607
          %s1609 = sand.u32 %s203, 1
          %s1610 = smul.addr %s1609, 128
          %s1611 = scalar_lea.vmem [#allocation4], %s1610
          %1612 = dma.done %s1608, 2048
        $region64: #{tpu_custom_call.1} parent=59 // pred_fallthru
          _
      $region60: #{tpu_custom_call.1} parent=5 // pred_fallthru
        _
    $region6: #{tpu_custom_call.1} parent=1 // loop_footer
      %s18 = sadd.s32 1, %s14
    $region7: #{tpu_custom_call.1} parent=1 // loop_footer_branch
      %13 = sbr.rel target = $region3
    $region8: #{tpu_custom_call.1} parent=1 // loop_exit
      _
    %1613 = vsyncpa [#allocation5], 1
    %s1614 = scalar_lea.sflag [#allocation5], 1
    %1615 = vsyncpa %s1614, 1

</llo_original>
